<compile_context>
chip_gen: v7x
topology: tpu7x:2x2x1
jax: 0.10.0
libtpu: 0.0.40
codegen_flags: <defaults>
</compile_context>

<pallas_src>
import functools

import jax
import jax.numpy as jnp
import numpy as np
from jax.experimental import pallas as pl
from jax.experimental.pallas import tpu as pltpu


def _vmem_spec():
    return pl.BlockSpec(memory_space=pltpu.MemorySpace.VMEM)


def _vmem_limit_bytes(n_nodes, n_edges, n_active):
    """Derive a VMEM limit from the actual chip instead of hard-coding 64 MiB."""
    try:
        cap = int(pltpu.get_tpu_info().vmem_capacity_bytes)
    except Exception:  # pragma: no cover - older jax / non-TPU tracing
        cap = 64 * 1024 * 1024
    # Rough working-set estimate (f32 activations, bf16 one-hot, slabs, I/O).
    est = (4 * (n_edges * (301 + 128 + 64 + 32)
                + n_nodes * (n_active * 32 + 64 + 128 + n_nodes + 128))
           + 2 * n_nodes * n_edges
           + (n_active + 2) * 32 * 256 * 4)
    limit = max(4 * est, 32 * 1024 * 1024)          # generous headroom / floor
    return int(min(limit, cap * 3 // 4))            # never claim all physical VMEM


# ---------------------------------------------------------------------------
# Single fused kernel: encoders + NNConv stack + final head
# ---------------------------------------------------------------------------
def bn_fused_kernel(nf_ref, ef_ref, dst_ref, adj_ref,
                    nw_ref, ew1_ref, ew2_ref, ew3_ref,
                    wslab_ref, bias_ref,
                    o_ref, *, n_active):
    f32 = jnp.float32
    bf16 = jnp.bfloat16
    cw = n_active * 32

    def mxdot(a, b):
        # bf16 MXU inputs, f32 accumulation.
        return jnp.dot(a.astype(bf16), b.astype(bf16), preferred_element_type=f32)

    # ---- node encoder: ReLU(nf @ Wn_pad + bn_pad) -> x [N, 32] (cols 16..31 == 0)
    x = jnp.maximum(mxdot(nf_ref[...], nw_ref[...]) + bias_ref[0:1, 0:32], 0.0)

    # ---- edge encoder: 3x (Linear + ReLU) -> e [E, 32]
    e = jnp.maximum(mxdot(ef_ref[...], ew1_ref[...]) + bias_ref[1:2, 0:128], 0.0)
    e = jnp.maximum(mxdot(e, ew2_ref[...]) + bias_ref[2:3, 0:64], 0.0)
    e = jnp.maximum(mxdot(e, ew3_ref[...]) + bias_ref[3:4, 0:32], 0.0)

    num_nodes = x.shape[0]
    num_edges = e.shape[0]

    # ---- one-time graph prologue (everything x-independent) -------------------
    # dst one-hot built pre-transposed: [N, E], entry (i, e) = (dst[e] == i)
    onehot_dst_t = (dst_ref[...] ==
                    jax.lax.broadcasted_iota(jnp.int32, (num_nodes, num_edges), 0)
                    ).astype(bf16)                                     # [N, E]
    e_agg = mxdot(onehot_dst_t, e)                                     # [N, 32]
    deg = jnp.sum(onehot_dst_t.astype(f32), axis=1, keepdims=True)     # [N, 1]
    # Per-layer additive constants for ALL layers in one lane-dense dot:
    #   c_all[:, 32l:32(l+1)] = e_agg @ We[l] + deg * net_b[l] + lin_b[l]
    c_all = (mxdot(e_agg, wslab_ref[n_active, :, 0:cw])
             + deg * bias_ref[4:5, 0:cw] + bias_ref[5:6, 0:cw])        # [N, cw]

    adj = adj_ref[...]                                                 # bf16 [N, N]

    # ---- NNConv stack (each layer followed by ReLU, per BN.forward) -----------
    for l in range(n_active):
        # One 64-wide dot: cols 0:32 = x @ Wx[l] (message), 32:64 = x @ lin_w[l].
        t = mxdot(x, wslab_ref[l, :, 0:64])                            # [N, 64]
        agg = mxdot(adj, t[:, 0:32])                                   # [N, 32]
        x = jnp.maximum(agg + t[:, 32:64] + c_all[:, l * 32:(l + 1) * 32], 0.0)

    # ---- final head: lane-dense [N, 128] slab, column 0 holds bn_last output
    # (padded bias columns are zero, so cols 1..127 of the slab are ~0; host
    #  only consumes column 0).
    o_ref[...] = mxdot(x, wslab_ref[n_active + 1, :, 0:128]) + bias_ref[6:7, 0:128]


# ---------------------------------------------------------------------------
# Parameters
# ---------------------------------------------------------------------------
def init_params(key, num_node_features=3, num_edge_features=301, n_conv=7):
    def lin_init(k, din, dout, scale=0.1):
        kw, kb = jax.random.split(k)
        return (jax.random.normal(kw, (din, dout), jnp.float32) * scale,
                jax.random.normal(kb, (1, dout), jnp.float32) * scale)

    keys = jax.random.split(key, 16)
    params = {}
    params["n"] = lin_init(keys[0], num_node_features, 16)
    params["e1"] = lin_init(keys[1], num_edge_features, 128)
    params["e2"] = lin_init(keys[2], 128, 64)
    params["e3"] = lin_init(keys[3], 64, 32)
    convs = []
    for i in range(n_conv):
        cin = 16 if i == 0 else 32
        kx, ke, kb, kl = jax.random.split(keys[4 + i], 4)
        net_wx = jax.random.normal(kx, (cin, 32), jnp.float32) * 0.1   # acts on x_j
        net_we = jax.random.normal(ke, (32, 32), jnp.float32) * 0.1    # acts on edge_attr
        net_b = jax.random.normal(kb, (1, 32), jnp.float32) * 0.1
        lin_w, lin_b = lin_init(kl, cin, 32)
        convs.append({"net_wx": net_wx, "net_we": net_we, "net_b": net_b,
                      "lin_w": lin_w, "lin_b": lin_b})
    params["convs"] = convs
    params["last"] = lin_init(keys[11], 32, 1)
    return params


# ---------------------------------------------------------------------------
# Forward (single fused pallas_call)
# ---------------------------------------------------------------------------
@functools.partial(jax.jit, static_argnames=("layers",))
def bn_forward(params, node_feature, edge_feature, src, dst, layers=5):
    n_active = max(1, min(layers, 7))
    n_nodes = node_feature.shape[0]
    n_edges = edge_feature.shape[0]
    cw = n_active * 32

    # --- graph structure precomputed once on host (tiny; exact in bf16) ---
    onehot_src = jax.nn.one_hot(src.reshape(-1), n_nodes, dtype=jnp.float32)  # [E, N]
    adj = jax.ops.segment_sum(onehot_src, dst.reshape(-1),
                              num_segments=n_nodes)                    # [N, N] counts
    adj = adj.astype(jnp.bfloat16)
    dst_row = dst.reshape(1, n_edges).astype(jnp.int32)

    # --- node encoder: pad contraction dim to a multiple of 8 and the output
    #     to 32 lanes (both exact: zero rows/cols) ---
    nw, nb = params["n"]
    fpad = (-node_feature.shape[1]) % 8
    nf_pad = jnp.pad(node_feature, ((0, 0), (0, fpad)))
    nw_pad = jnp.pad(nw, ((0, fpad), (0, 32 - nw.shape[1])))
    nb_pad = jnp.pad(nb, ((0, 0), (0, 32 - nb.shape[1])))

    # --- weight slab [n_active + 2, 32, 256] ---
    #   rows 0..n_active-1 : [Wx_pad | lin_w_pad]   (cols 0:64)
    #   row  n_active      : concat_l net_we[l]     (cols 0:cw)
    #   row  n_active+1    : bn_last weight         (cols 0:128, col 0 real)
    rows, netb_list, linb_list = [], [], []
    for l in range(n_active):
        c = params["convs"][l]
        wx = jnp.pad(c["net_wx"], ((0, 32 - c["net_wx"].shape[0]), (0, 0)))   # [32,32]
        lw = jnp.pad(c["lin_w"], ((0, 32 - c["lin_w"].shape[0]), (0, 0)))     # [32,32]
        row = jnp.concatenate([wx, lw], axis=1)                               # [32,64]
        rows.append(jnp.pad(row, ((0, 0), (0, 256 - 64))))
        netb_list.append(c["net_b"])
        linb_list.append(c["lin_b"])
    ewe_cat = jnp.concatenate(
        [params["convs"][l]["net_we"] for l in range(n_active)], axis=1)      # [32,cw]
    rows.append(jnp.pad(ewe_cat, ((0, 0), (0, 256 - cw))))
    last_w, last_b = params["last"]
    last_w_pad = jnp.pad(last_w, ((0, 0), (0, 128 - last_w.shape[1])))        # [32,128]
    rows.append(jnp.pad(last_w_pad, ((0, 0), (0, 256 - 128))))
    wslab = jnp.stack(rows)                                                   # [L+2,32,256]

    # --- bias slab [7, 256]: nb, eb1, eb2, eb3, net_b cat, lin_b cat, last_b ---
    def _row(b):
        return jnp.pad(b, ((0, 0), (0, 256 - b.shape[1])))
    netb_cat = jnp.concatenate(netb_list, axis=1)                             # [1,cw]
    linb_cat = jnp.concatenate(linb_list, axis=1)                             # [1,cw]
    last_b_pad = jnp.pad(last_b, ((0, 0), (0, 128 - last_b.shape[1])))        # [1,128]
    bias_slab = jnp.concatenate(
        [_row(nb_pad), _row(params["e1"][1]), _row(params["e2"][1]),
         _row(params["e3"][1]), _row(netb_cat), _row(linb_cat),
         _row(last_b_pad)], axis=0)                                           # [7,256]

    kernel = functools.partial(bn_fused_kernel, n_active=n_active)
    out_slab = pl.pallas_call(
        kernel,
        out_shape=jax.ShapeDtypeStruct((n_nodes, 128), jnp.float32),
        in_specs=[_vmem_spec()] * 10,
        out_specs=_vmem_spec(),
        compiler_params=pltpu.CompilerParams(
            vmem_limit_bytes=_vmem_limit_bytes(n_nodes, n_edges, n_active)),
    )(nf_pad, edge_feature, dst_row, adj,
      nw_pad, params["e1"][0], params["e2"][0], params["e3"][0],
      wslab, bias_slab)

    # bn_last: Linear(32 -> 1) then squeeze(-1)  ->  take column 0 of the slab.
    return out_slab[:, 0]


# ---------------------------------------------------------------------------
# Pure-JAX reference (independent semantics check, f32 / HIGHEST precision)
# ---------------------------------------------------------------------------
def bn_forward_ref(params, node_feature, edge_feature, src, dst, layers=5):
    hp = jax.lax.Precision.HIGHEST

    def lin(x, w, b):
        return jnp.dot(x, w, precision=hp) + b

    x = jax.nn.relu(lin(node_feature, *params["n"]))
    e = jax.nn.relu(lin(edge_feature, *params["e1"]))
    e = jax.nn.relu(lin(e, *params["e2"]))
    e = jax.nn.relu(lin(e, *params["e3"]))

    n_nodes = x.shape[0]
    src_f = src.reshape(-1)
    dst_f = dst.reshape(-1)
    for i in range(max(1, min(layers, 7))):
        c = params["convs"][i]
        net_w = jnp.concatenate([c["net_wx"], c["net_we"]], axis=0)
        x_j = x[src_f]
        msg = lin(jnp.concatenate([x_j, e], axis=-1), net_w, c["net_b"])
        agg = jax.ops.segment_sum(msg, dst_f, num_segments=n_nodes)
        x = jax.nn.relu(agg + lin(x, c["lin_w"], c["lin_b"]))

    out = lin(x, *params["last"])
    return jnp.squeeze(out, axis=-1)


# ---------------------------------------------------------------------------
if __name__ == "__main__":
    key = jax.random.PRNGKey(0)
    k_param, k_node, k_edge, k_src, k_dst = jax.random.split(key, 5)

    NUM_NODES = 8
    NUM_EDGES = 16
    NUM_NODE_FEATURES = 3
    NUM_EDGE_FEATURES = 301
    LAYERS = 5

    params = init_params(k_param, NUM_NODE_FEATURES, NUM_EDGE_FEATURES)

    node_feature = jax.random.normal(
        k_node, (NUM_NODES, NUM_NODE_FEATURES), jnp.float32)
    edge_feature = jax.random.normal(
        k_edge, (NUM_EDGES, NUM_EDGE_FEATURES), jnp.float32)
    src = jax.random.randint(k_src, (NUM_EDGES,), 0, NUM_NODES, jnp.int32)
    dst = jax.random.randint(k_dst, (NUM_EDGES,), 0, NUM_NODES, jnp.int32)

    out = bn_forward(params, node_feature, edge_feature, src, dst, layers=LAYERS)
    out = jax.block_until_ready(out)

    ref = bn_forward_ref(params, node_feature, edge_feature, src, dst, layers=LAYERS)
    ref = jax.block_until_ready(ref)

    assert out.shape == (NUM_NODES,), out.shape
    out_np = np.asarray(out)
    ref_np = np.asarray(ref)
    # Kernel runs the MXU with bf16 inputs (f32 accumulation) per the perf
    # review; scale the absolute tolerance with the output magnitude.
    atol = 5e-2 * max(1.0, float(np.max(np.abs(ref_np))))
    np.testing.assert_allclose(out_np, ref_np, rtol=5e-2, atol=atol)

    print("KERNEL_OK")
</pallas_src>

<mosaic_0001>
module attributes {stable_mosaic.version = 11 : i64} {
  func.func @bn_fused_kernel(%arg0: memref<8x8xf32, #tpu.memory_space<vmem>>, %arg1: memref<16x301xf32, #tpu.memory_space<vmem>>, %arg2: memref<1x16xi32, #tpu.memory_space<vmem>>, %arg3: memref<8x8xbf16, #tpu.memory_space<vmem>>, %arg4: memref<8x32xf32, #tpu.memory_space<vmem>>, %arg5: memref<301x128xf32, #tpu.memory_space<vmem>>, %arg6: memref<128x64xf32, #tpu.memory_space<vmem>>, %arg7: memref<64x32xf32, #tpu.memory_space<vmem>>, %arg8: memref<7x32x256xf32, #tpu.memory_space<vmem>>, %arg9: memref<7x256xf32, #tpu.memory_space<vmem>>, %arg10: memref<8x128xf32, #tpu.memory_space<vmem>>) attributes {dimension_semantics = [], scalar_prefetch = 0 : i64, scratch_operands = 0 : i64, tpu.core_type = #tpu.core_type<tc>} {
    %c0 = arith.constant 0 : index
    %c0_0 = arith.constant 0 : index
    %0 = vector.load %arg0[%c0, %c0_0] : memref<8x8xf32, #tpu.memory_space<vmem>>, vector<8x8xf32>
    %c0_1 = arith.constant 0 : index
    %c0_2 = arith.constant 0 : index
    %1 = vector.load %arg4[%c0_1, %c0_2] : memref<8x32xf32, #tpu.memory_space<vmem>>, vector<8x32xf32>
    %2 = arith.truncf %0 : vector<8x8xf32> to vector<8x8xbf16>
    %3 = arith.truncf %1 : vector<8x32xf32> to vector<8x32xbf16>
    %cst = arith.constant dense<0.000000e+00> : vector<8x32xf32>
    %4 = tpu.matmul %2, %3, %cst {dimension_numbers = #tpu.dot_dimension_numbers<[1], [0], [0], [1], [0, 0, 1, 1], [], []>} : vector<8x8xbf16>, vector<8x32xbf16>, vector<8x32xf32> -> vector<8x32xf32>
    %c0_3 = arith.constant 0 : index
    %c0_4 = arith.constant 0 : index
    %5 = vector.load %arg9[%c0_3, %c0_4] : memref<7x256xf32, #tpu.memory_space<vmem>>, vector<1x32xf32>
    %6 = vector.broadcast %5 : vector<1x32xf32> to vector<8x32xf32>
    %7 = arith.addf %4, %6 : vector<8x32xf32>
    %cst_5 = arith.constant 0.000000e+00 : f32
    %8 = vector.broadcast %cst_5 : f32 to vector<8x32xf32>
    %9 = arith.maximumf %7, %8 : vector<8x32xf32>
    %c0_6 = arith.constant 0 : index
    %c0_7 = arith.constant 0 : index
    %10 = vector.load %arg1[%c0_6, %c0_7] : memref<16x301xf32, #tpu.memory_space<vmem>>, vector<16x301xf32>
    %c0_8 = arith.constant 0 : index
    %c0_9 = arith.constant 0 : index
    %11 = vector.load %arg5[%c0_8, %c0_9] : memref<301x128xf32, #tpu.memory_space<vmem>>, vector<301x128xf32>
    %12 = arith.truncf %10 : vector<16x301xf32> to vector<16x301xbf16>
    %13 = arith.truncf %11 : vector<301x128xf32> to vector<301x128xbf16>
    %cst_10 = arith.constant dense<0.000000e+00> : vector<16x128xf32>
    %14 = tpu.matmul %12, %13, %cst_10 {dimension_numbers = #tpu.dot_dimension_numbers<[1], [0], [0], [1], [0, 0, 1, 1], [], []>} : vector<16x301xbf16>, vector<301x128xbf16>, vector<16x128xf32> -> vector<16x128xf32>
    %c1 = arith.constant 1 : index
    %c0_11 = arith.constant 0 : index
    %15 = vector.load %arg9[%c1, %c0_11] : memref<7x256xf32, #tpu.memory_space<vmem>>, vector<1x128xf32>
    %16 = vector.broadcast %15 : vector<1x128xf32> to vector<16x128xf32>
    %17 = arith.addf %14, %16 : vector<16x128xf32>
    %cst_12 = arith.constant 0.000000e+00 : f32
    %18 = vector.broadcast %cst_12 : f32 to vector<16x128xf32>
    %19 = arith.maximumf %17, %18 : vector<16x128xf32>
    %c0_13 = arith.constant 0 : index
    %c0_14 = arith.constant 0 : index
    %20 = vector.load %arg6[%c0_13, %c0_14] : memref<128x64xf32, #tpu.memory_space<vmem>>, vector<128x64xf32>
    %21 = arith.truncf %19 : vector<16x128xf32> to vector<16x128xbf16>
    %22 = arith.truncf %20 : vector<128x64xf32> to vector<128x64xbf16>
    %cst_15 = arith.constant dense<0.000000e+00> : vector<16x64xf32>
    %23 = tpu.matmul %21, %22, %cst_15 {dimension_numbers = #tpu.dot_dimension_numbers<[1], [0], [0], [1], [0, 0, 1, 1], [], []>} : vector<16x128xbf16>, vector<128x64xbf16>, vector<16x64xf32> -> vector<16x64xf32>
    %c2 = arith.constant 2 : index
    %c0_16 = arith.constant 0 : index
    %24 = vector.load %arg9[%c2, %c0_16] : memref<7x256xf32, #tpu.memory_space<vmem>>, vector<1x64xf32>
    %25 = vector.broadcast %24 : vector<1x64xf32> to vector<16x64xf32>
    %26 = arith.addf %23, %25 : vector<16x64xf32>
    %cst_17 = arith.constant 0.000000e+00 : f32
    %27 = vector.broadcast %cst_17 : f32 to vector<16x64xf32>
    %28 = arith.maximumf %26, %27 : vector<16x64xf32>
    %c0_18 = arith.constant 0 : index
    %c0_19 = arith.constant 0 : index
    %29 = vector.load %arg7[%c0_18, %c0_19] : memref<64x32xf32, #tpu.memory_space<vmem>>, vector<64x32xf32>
    %30 = arith.truncf %28 : vector<16x64xf32> to vector<16x64xbf16>
    %31 = arith.truncf %29 : vector<64x32xf32> to vector<64x32xbf16>
    %cst_20 = arith.constant dense<0.000000e+00> : vector<16x32xf32>
    %32 = tpu.matmul %30, %31, %cst_20 {dimension_numbers = #tpu.dot_dimension_numbers<[1], [0], [0], [1], [0, 0, 1, 1], [], []>} : vector<16x64xbf16>, vector<64x32xbf16>, vector<16x32xf32> -> vector<16x32xf32>
    %c3 = arith.constant 3 : index
    %c0_21 = arith.constant 0 : index
    %33 = vector.load %arg9[%c3, %c0_21] : memref<7x256xf32, #tpu.memory_space<vmem>>, vector<1x32xf32>
    %34 = vector.broadcast %33 : vector<1x32xf32> to vector<16x32xf32>
    %35 = arith.addf %32, %34 : vector<16x32xf32>
    %cst_22 = arith.constant 0.000000e+00 : f32
    %36 = vector.broadcast %cst_22 : f32 to vector<16x32xf32>
    %37 = arith.maximumf %35, %36 : vector<16x32xf32>
    %c0_23 = arith.constant 0 : index
    %c0_24 = arith.constant 0 : index
    %38 = vector.load %arg2[%c0_23, %c0_24] : memref<1x16xi32, #tpu.memory_space<vmem>>, vector<1x16xi32>
    %39 = tpu.iota {dimensions = array<i32: 0>} : vector<8x16xi32>
    %40 = vector.broadcast %38 : vector<1x16xi32> to vector<8x16xi32>
    %41 = arith.cmpi eq, %40, %39 : vector<8x16xi32>
    %42 = arith.extui %41 : vector<8x16xi1> to vector<8x16xi32>
    %43 = arith.sitofp %42 : vector<8x16xi32> to vector<8x16xf32>
    %44 = arith.truncf %43 : vector<8x16xf32> to vector<8x16xbf16>
    %45 = arith.truncf %37 : vector<16x32xf32> to vector<16x32xbf16>
    %cst_25 = arith.constant dense<0.000000e+00> : vector<8x32xf32>
    %46 = tpu.matmul %44, %45, %cst_25 {dimension_numbers = #tpu.dot_dimension_numbers<[1], [0], [0], [1], [0, 0, 1, 1], [], []>} : vector<8x16xbf16>, vector<16x32xbf16>, vector<8x32xf32> -> vector<8x32xf32>
    %47 = arith.extf %44 : vector<8x16xbf16> to vector<8x16xf32>
    %cst_26 = arith.constant dense<0.000000e+00> : vector<8xf32>
    %48 = vector.multi_reduction <add>, %47, %cst_26 [1] : vector<8x16xf32> to vector<8xf32>
    %49 = vector.shape_cast %48 : vector<8xf32> to vector<8x1xf32>
    %c5 = arith.constant 5 : index
    %c0_27 = arith.constant 0 : index
    %c0_28 = arith.constant 0 : index
    %50 = vector.load %arg8[%c5, %c0_27, %c0_28] : memref<7x32x256xf32, #tpu.memory_space<vmem>>, vector<1x32x160xf32>
    %51 = vector.shape_cast %50 : vector<1x32x160xf32> to vector<32x160xf32>
    %52 = arith.truncf %46 : vector<8x32xf32> to vector<8x32xbf16>
    %53 = arith.truncf %51 : vector<32x160xf32> to vector<32x160xbf16>
    %cst_29 = arith.constant dense<0.000000e+00> : vector<8x160xf32>
    %54 = tpu.matmul %52, %53, %cst_29 {dimension_numbers = #tpu.dot_dimension_numbers<[1], [0], [0], [1], [0, 0, 1, 1], [], []>} : vector<8x32xbf16>, vector<32x160xbf16>, vector<8x160xf32> -> vector<8x160xf32>
    %c4 = arith.constant 4 : index
    %c0_30 = arith.constant 0 : index
    %55 = vector.load %arg9[%c4, %c0_30] : memref<7x256xf32, #tpu.memory_space<vmem>>, vector<1x160xf32>
    %56 = vector.broadcast %49 : vector<8x1xf32> to vector<8x160xf32>
    %57 = vector.broadcast %55 : vector<1x160xf32> to vector<8x160xf32>
    %58 = arith.mulf %56, %57 : vector<8x160xf32>
    %59 = arith.addf %54, %58 : vector<8x160xf32>
    %c5_31 = arith.constant 5 : index
    %c0_32 = arith.constant 0 : index
    %60 = vector.load %arg9[%c5_31, %c0_32] : memref<7x256xf32, #tpu.memory_space<vmem>>, vector<1x160xf32>
    %61 = vector.broadcast %60 : vector<1x160xf32> to vector<8x160xf32>
    %62 = arith.addf %59, %61 : vector<8x160xf32>
    %c0_33 = arith.constant 0 : index
    %c0_34 = arith.constant 0 : index
    %63 = vector.load %arg3[%c0_33, %c0_34] : memref<8x8xbf16, #tpu.memory_space<vmem>>, vector<8x8xbf16>
    %c0_35 = arith.constant 0 : index
    %c0_36 = arith.constant 0 : index
    %c0_37 = arith.constant 0 : index
    %64 = vector.load %arg8[%c0_35, %c0_36, %c0_37] : memref<7x32x256xf32, #tpu.memory_space<vmem>>, vector<1x32x64xf32>
    %65 = vector.shape_cast %64 : vector<1x32x64xf32> to vector<32x64xf32>
    %66 = arith.truncf %9 : vector<8x32xf32> to vector<8x32xbf16>
    %67 = arith.truncf %65 : vector<32x64xf32> to vector<32x64xbf16>
    %cst_38 = arith.constant dense<0.000000e+00> : vector<8x64xf32>
    %68 = tpu.matmul %66, %67, %cst_38 {dimension_numbers = #tpu.dot_dimension_numbers<[1], [0], [0], [1], [0, 0, 1, 1], [], []>} : vector<8x32xbf16>, vector<32x64xbf16>, vector<8x64xf32> -> vector<8x64xf32>
    %69 = vector.extract_strided_slice %68 {offsets = [0, 0], sizes = [8, 32], strides = [1, 1]} : vector<8x64xf32> to vector<8x32xf32>
    %70 = arith.truncf %69 : vector<8x32xf32> to vector<8x32xbf16>
    %cst_39 = arith.constant dense<0.000000e+00> : vector<8x32xf32>
    %71 = tpu.matmul %63, %70, %cst_39 {dimension_numbers = #tpu.dot_dimension_numbers<[1], [0], [0], [1], [0, 0, 1, 1], [], []>} : vector<8x8xbf16>, vector<8x32xbf16>, vector<8x32xf32> -> vector<8x32xf32>
    %72 = vector.extract_strided_slice %68 {offsets = [0, 32], sizes = [8, 32], strides = [1, 1]} : vector<8x64xf32> to vector<8x32xf32>
    %73 = arith.addf %71, %72 : vector<8x32xf32>
    %74 = vector.extract_strided_slice %62 {offsets = [0, 0], sizes = [8, 32], strides = [1, 1]} : vector<8x160xf32> to vector<8x32xf32>
    %75 = arith.addf %73, %74 : vector<8x32xf32>
    %cst_40 = arith.constant 0.000000e+00 : f32
    %76 = vector.broadcast %cst_40 : f32 to vector<8x32xf32>
    %77 = arith.maximumf %75, %76 : vector<8x32xf32>
    %c1_41 = arith.constant 1 : index
    %c0_42 = arith.constant 0 : index
    %c0_43 = arith.constant 0 : index
    %78 = vector.load %arg8[%c1_41, %c0_42, %c0_43] : memref<7x32x256xf32, #tpu.memory_space<vmem>>, vector<1x32x64xf32>
    %79 = vector.shape_cast %78 : vector<1x32x64xf32> to vector<32x64xf32>
    %80 = arith.truncf %77 : vector<8x32xf32> to vector<8x32xbf16>
    %81 = arith.truncf %79 : vector<32x64xf32> to vector<32x64xbf16>
    %cst_44 = arith.constant dense<0.000000e+00> : vector<8x64xf32>
    %82 = tpu.matmul %80, %81, %cst_44 {dimension_numbers = #tpu.dot_dimension_numbers<[1], [0], [0], [1], [0, 0, 1, 1], [], []>} : vector<8x32xbf16>, vector<32x64xbf16>, vector<8x64xf32> -> vector<8x64xf32>
    %83 = vector.extract_strided_slice %82 {offsets = [0, 0], sizes = [8, 32], strides = [1, 1]} : vector<8x64xf32> to vector<8x32xf32>
    %84 = arith.truncf %83 : vector<8x32xf32> to vector<8x32xbf16>
    %cst_45 = arith.constant dense<0.000000e+00> : vector<8x32xf32>
    %85 = tpu.matmul %63, %84, %cst_45 {dimension_numbers = #tpu.dot_dimension_numbers<[1], [0], [0], [1], [0, 0, 1, 1], [], []>} : vector<8x8xbf16>, vector<8x32xbf16>, vector<8x32xf32> -> vector<8x32xf32>
    %86 = vector.extract_strided_slice %82 {offsets = [0, 32], sizes = [8, 32], strides = [1, 1]} : vector<8x64xf32> to vector<8x32xf32>
    %87 = arith.addf %85, %86 : vector<8x32xf32>
    %88 = vector.extract_strided_slice %62 {offsets = [0, 32], sizes = [8, 32], strides = [1, 1]} : vector<8x160xf32> to vector<8x32xf32>
    %89 = arith.addf %87, %88 : vector<8x32xf32>
    %cst_46 = arith.constant 0.000000e+00 : f32
    %90 = vector.broadcast %cst_46 : f32 to vector<8x32xf32>
    %91 = arith.maximumf %89, %90 : vector<8x32xf32>
    %c2_47 = arith.constant 2 : index
    %c0_48 = arith.constant 0 : index
    %c0_49 = arith.constant 0 : index
    %92 = vector.load %arg8[%c2_47, %c0_48, %c0_49] : memref<7x32x256xf32, #tpu.memory_space<vmem>>, vector<1x32x64xf32>
    %93 = vector.shape_cast %92 : vector<1x32x64xf32> to vector<32x64xf32>
    %94 = arith.truncf %91 : vector<8x32xf32> to vector<8x32xbf16>
    %95 = arith.truncf %93 : vector<32x64xf32> to vector<32x64xbf16>
    %cst_50 = arith.constant dense<0.000000e+00> : vector<8x64xf32>
    %96 = tpu.matmul %94, %95, %cst_50 {dimension_numbers = #tpu.dot_dimension_numbers<[1], [0], [0], [1], [0, 0, 1, 1], [], []>} : vector<8x32xbf16>, vector<32x64xbf16>, vector<8x64xf32> -> vector<8x64xf32>
    %97 = vector.extract_strided_slice %96 {offsets = [0, 0], sizes = [8, 32], strides = [1, 1]} : vector<8x64xf32> to vector<8x32xf32>
    %98 = arith.truncf %97 : vector<8x32xf32> to vector<8x32xbf16>
    %cst_51 = arith.constant dense<0.000000e+00> : vector<8x32xf32>
    %99 = tpu.matmul %63, %98, %cst_51 {dimension_numbers = #tpu.dot_dimension_numbers<[1], [0], [0], [1], [0, 0, 1, 1], [], []>} : vector<8x8xbf16>, vector<8x32xbf16>, vector<8x32xf32> -> vector<8x32xf32>
    %100 = vector.extract_strided_slice %96 {offsets = [0, 32], sizes = [8, 32], strides = [1, 1]} : vector<8x64xf32> to vector<8x32xf32>
    %101 = arith.addf %99, %100 : vector<8x32xf32>
    %102 = vector.extract_strided_slice %62 {offsets = [0, 64], sizes = [8, 32], strides = [1, 1]} : vector<8x160xf32> to vector<8x32xf32>
    %103 = arith.addf %101, %102 : vector<8x32xf32>
    %cst_52 = arith.constant 0.000000e+00 : f32
    %104 = vector.broadcast %cst_52 : f32 to vector<8x32xf32>
    %105 = arith.maximumf %103, %104 : vector<8x32xf32>
    %c3_53 = arith.constant 3 : index
    %c0_54 = arith.constant 0 : index
    %c0_55 = arith.constant 0 : index
    %106 = vector.load %arg8[%c3_53, %c0_54, %c0_55] : memref<7x32x256xf32, #tpu.memory_space<vmem>>, vector<1x32x64xf32>
    %107 = vector.shape_cast %106 : vector<1x32x64xf32> to vector<32x64xf32>
    %108 = arith.truncf %105 : vector<8x32xf32> to vector<8x32xbf16>
    %109 = arith.truncf %107 : vector<32x64xf32> to vector<32x64xbf16>
    %cst_56 = arith.constant dense<0.000000e+00> : vector<8x64xf32>
    %110 = tpu.matmul %108, %109, %cst_56 {dimension_numbers = #tpu.dot_dimension_numbers<[1], [0], [0], [1], [0, 0, 1, 1], [], []>} : vector<8x32xbf16>, vector<32x64xbf16>, vector<8x64xf32> -> vector<8x64xf32>
    %111 = vector.extract_strided_slice %110 {offsets = [0, 0], sizes = [8, 32], strides = [1, 1]} : vector<8x64xf32> to vector<8x32xf32>
    %112 = arith.truncf %111 : vector<8x32xf32> to vector<8x32xbf16>
    %cst_57 = arith.constant dense<0.000000e+00> : vector<8x32xf32>
    %113 = tpu.matmul %63, %112, %cst_57 {dimension_numbers = #tpu.dot_dimension_numbers<[1], [0], [0], [1], [0, 0, 1, 1], [], []>} : vector<8x8xbf16>, vector<8x32xbf16>, vector<8x32xf32> -> vector<8x32xf32>
    %114 = vector.extract_strided_slice %110 {offsets = [0, 32], sizes = [8, 32], strides = [1, 1]} : vector<8x64xf32> to vector<8x32xf32>
    %115 = arith.addf %113, %114 : vector<8x32xf32>
    %116 = vector.extract_strided_slice %62 {offsets = [0, 96], sizes = [8, 32], strides = [1, 1]} : vector<8x160xf32> to vector<8x32xf32>
    %117 = arith.addf %115, %116 : vector<8x32xf32>
    %cst_58 = arith.constant 0.000000e+00 : f32
    %118 = vector.broadcast %cst_58 : f32 to vector<8x32xf32>
    %119 = arith.maximumf %117, %118 : vector<8x32xf32>
    %c4_59 = arith.constant 4 : index
    %c0_60 = arith.constant 0 : index
    %c0_61 = arith.constant 0 : index
    %120 = vector.load %arg8[%c4_59, %c0_60, %c0_61] : memref<7x32x256xf32, #tpu.memory_space<vmem>>, vector<1x32x64xf32>
    %121 = vector.shape_cast %120 : vector<1x32x64xf32> to vector<32x64xf32>
    %122 = arith.truncf %119 : vector<8x32xf32> to vector<8x32xbf16>
    %123 = arith.truncf %121 : vector<32x64xf32> to vector<32x64xbf16>
    %cst_62 = arith.constant dense<0.000000e+00> : vector<8x64xf32>
    %124 = tpu.matmul %122, %123, %cst_62 {dimension_numbers = #tpu.dot_dimension_numbers<[1], [0], [0], [1], [0, 0, 1, 1], [], []>} : vector<8x32xbf16>, vector<32x64xbf16>, vector<8x64xf32> -> vector<8x64xf32>
    %125 = vector.extract_strided_slice %124 {offsets = [0, 0], sizes = [8, 32], strides = [1, 1]} : vector<8x64xf32> to vector<8x32xf32>
    %126 = arith.truncf %125 : vector<8x32xf32> to vector<8x32xbf16>
    %cst_63 = arith.constant dense<0.000000e+00> : vector<8x32xf32>
    %127 = tpu.matmul %63, %126, %cst_63 {dimension_numbers = #tpu.dot_dimension_numbers<[1], [0], [0], [1], [0, 0, 1, 1], [], []>} : vector<8x8xbf16>, vector<8x32xbf16>, vector<8x32xf32> -> vector<8x32xf32>
    %128 = vector.extract_strided_slice %124 {offsets = [0, 32], sizes = [8, 32], strides = [1, 1]} : vector<8x64xf32> to vector<8x32xf32>
    %129 = arith.addf %127, %128 : vector<8x32xf32>
    %130 = vector.extract_strided_slice %62 {offsets = [0, 128], sizes = [8, 32], strides = [1, 1]} : vector<8x160xf32> to vector<8x32xf32>
    %131 = arith.addf %129, %130 : vector<8x32xf32>
    %cst_64 = arith.constant 0.000000e+00 : f32
    %132 = vector.broadcast %cst_64 : f32 to vector<8x32xf32>
    %133 = arith.maximumf %131, %132 : vector<8x32xf32>
    %c6 = arith.constant 6 : index
    %c0_65 = arith.constant 0 : index
    %c0_66 = arith.constant 0 : index
    %134 = vector.load %arg8[%c6, %c0_65, %c0_66] : memref<7x32x256xf32, #tpu.memory_space<vmem>>, vector<1x32x128xf32>
    %135 = vector.shape_cast %134 : vector<1x32x128xf32> to vector<32x128xf32>
    %136 = arith.truncf %133 : vector<8x32xf32> to vector<8x32xbf16>
    %137 = arith.truncf %135 : vector<32x128xf32> to vector<32x128xbf16>
    %cst_67 = arith.constant dense<0.000000e+00> : vector<8x128xf32>
    %138 = tpu.matmul %136, %137, %cst_67 {dimension_numbers = #tpu.dot_dimension_numbers<[1], [0], [0], [1], [0, 0, 1, 1], [], []>} : vector<8x32xbf16>, vector<32x128xbf16>, vector<8x128xf32> -> vector<8x128xf32>
    %c6_68 = arith.constant 6 : index
    %c0_69 = arith.constant 0 : index
    %139 = vector.load %arg9[%c6_68, %c0_69] : memref<7x256xf32, #tpu.memory_space<vmem>>, vector<1x128xf32>
    %140 = vector.broadcast %139 : vector<1x128xf32> to vector<8x128xf32>
    %141 = arith.addf %138, %140 : vector<8x128xf32>
    %c0_70 = arith.constant 0 : index
    %c0_71 = arith.constant 0 : index
    %142 = vector.load %arg10[%c0_70, %c0_71] : memref<8x128xf32, #tpu.memory_space<vmem>>, vector<8x128xf32>
    tpu.vector_store %arg10[%c0_70, %c0_71], %141 {strides = array<i32>} : memref<8x128xf32, #tpu.memory_space<vmem>>, vector<8x128xf32>,
    return
  }
}

</mosaic_0001>

<llo_original>
// kernel: bn_forward.1
$region0: #{bn_forward.1}
  #allocation0 [shape = 'u32[]', space=smem, size = 0x4, offset = 0x4, fixed_abs, tag = 'smem constant byte address 0x4 - core index']
  #allocation1 [shape = 'u32[144,128]{1,0:T(1,128)}', space=vmem, size = 0x12000, scoped, tag = 'internal scratch']
  %s0 = inlined_call_operand.vmem [shape: f32[8,8], index: 0, kind: input, shape index: {}]
  %s1 = inlined_call_operand.vmem [shape: f32[16,301], index: 1, kind: input, shape index: {}]
  %s2 = inlined_call_operand.vmem [shape: s32[1,16], index: 2, kind: input, shape index: {}]
  %s3 = inlined_call_operand.vmem [shape: bf16[8,8], index: 3, kind: input, shape index: {}]
  %s4 = inlined_call_operand.vmem [shape: f32[8,32], index: 4, kind: input, shape index: {}]
  %s5 = inlined_call_operand.vmem [shape: f32[301,128], index: 5, kind: input, shape index: {}]
  %s6 = inlined_call_operand.vmem [shape: f32[128,64], index: 6, kind: input, shape index: {}]
  %s7 = inlined_call_operand.vmem [shape: f32[64,32], index: 7, kind: input, shape index: {}]
  %s8 = inlined_call_operand.vmem [shape: f32[7,32,256], index: 8, kind: input, shape index: {}]
  %s9 = inlined_call_operand.vmem [shape: f32[7,256], index: 9, kind: input, shape index: {}]
  %s10 = inlined_call_operand.vmem [shape: f32[8,128], index: 10, kind: output, shape index: {}]
  %s11 = sld [smem:[#allocation0]]
  $region50: #{bn_forward.1} parent=0
    _
  %s13 = ssub.s32 1, %s11
  %s14 = scalar_select 0, %s13, %s11
  // Predicated region
  $region2: #{bn_forward.1} parent=0 // pred_check
    _
  $region3: #{bn_forward.1} parent=0 // pred_check_branch
    %16 = sbr.rel (0) target = $region5
  $region4: #{bn_forward.1} parent=0 // pred_region
    _
  $region5: #{bn_forward.1} parent=0 // pred_fallthru
    _
  // Predicated region
  $region6: #{bn_forward.1} parent=0 // pred_check
    _
  $region7: #{bn_forward.1} parent=0 // pred_check_branch
    %18 = sbr.rel (0) target = $region9
  $region8: #{bn_forward.1} parent=0 // pred_region
    _
  $region9: #{bn_forward.1} parent=0 // pred_fallthru
    _
  // Predicated region
  $region10: #{bn_forward.1} parent=0 // pred_check
    _
  $region11: #{bn_forward.1} parent=0 // pred_check_branch
    %20 = sbr.rel (0) target = $region13
  $region12: #{bn_forward.1} parent=0 // pred_region
    _
  $region13: #{bn_forward.1} parent=0 // pred_fallthru
    _
  // Predicated region
  $region14: #{bn_forward.1} parent=0 // pred_check
    _
  $region15: #{bn_forward.1} parent=0 // pred_check_branch
    %22 = sbr.rel (0) target = $region17
  $region16: #{bn_forward.1} parent=0 // pred_region
    _
  $region17: #{bn_forward.1} parent=0 // pred_fallthru
    _
  // Predicated region
  $region18: #{bn_forward.1} parent=0 // pred_check
    _
  $region19: #{bn_forward.1} parent=0 // pred_check_branch
    %24 = sbr.rel (0) target = $region21
  $region20: #{bn_forward.1} parent=0 // pred_region
    _
  $region21: #{bn_forward.1} parent=0 // pred_fallthru
    _
  // Predicated region
  $region22: #{bn_forward.1} parent=0 // pred_check
    _
  $region23: #{bn_forward.1} parent=0 // pred_check_branch
    %26 = sbr.rel (0) target = $region25
  $region24: #{bn_forward.1} parent=0 // pred_region
    _
  $region25: #{bn_forward.1} parent=0 // pred_fallthru
    _
  // Predicated region
  $region26: #{bn_forward.1} parent=0 // pred_check
    _
  $region27: #{bn_forward.1} parent=0 // pred_check_branch
    %28 = sbr.rel (0) target = $region29
  $region28: #{bn_forward.1} parent=0 // pred_region
    _
  $region29: #{bn_forward.1} parent=0 // pred_fallthru
    _
  // Predicated region
  $region30: #{bn_forward.1} parent=0 // pred_check
    _
  $region31: #{bn_forward.1} parent=0 // pred_check_branch
    %30 = sbr.rel (0) target = $region33
  $region32: #{bn_forward.1} parent=0 // pred_region
    _
  $region33: #{bn_forward.1} parent=0 // pred_fallthru
    _
  // Predicated region
  $region34: #{bn_forward.1} parent=0 // pred_check
    _
  $region35: #{bn_forward.1} parent=0 // pred_check_branch
    %32 = sbr.rel (0) target = $region37
  $region36: #{bn_forward.1} parent=0 // pred_region
    _
  $region37: #{bn_forward.1} parent=0 // pred_fallthru
    _
  // Predicated region
  $region38: #{bn_forward.1} parent=0 // pred_check
    _
  $region39: #{bn_forward.1} parent=0 // pred_check_branch
    %34 = sbr.rel (0) target = $region41
  $region40: #{bn_forward.1} parent=0 // pred_region
    _
  $region41: #{bn_forward.1} parent=0 // pred_fallthru
    _
  %v36 = vld [vmem:[%s0] sm:$0xff]
  %v37 = vld [vmem:[%s4] sm:$0xff]
  %v38 = vpack.c.bf16 %v36, %v36
  %v39 = vpack.c.bf16 %v37, %v37
  %v40 = vld [vmem:[%s9] ss:$0 sm:$0xff]
  %vm41 = vcmask 64512
  %v43 = vsel %vm41, %v38, 0
  %vm45 = vcmask 1043456
  %v47 = vsel %vm45, %v39, 0
  %49 = vmatprep.subr.bf16.mxu0 0
  %50 = vmatpush1.bf16.msra.mxu0 %v47
  %51 = vmatprep.subr.bf16.mxu0 0
  %52 = vmatpush1.bf16.msra.mxu0 0
  %53 = vmatprep.subr.bf16.mxu0 0
  %54 = vmatpush1.bf16.msra.mxu0 0
  %55 = vmatprep.subr.bf16.mxu0 0
  %56 = vmatpush1.bf16.msra.mxu0 0
  %57 = vmatprep.subr.bf16.mxu0 0
  %58 = vmatpush1.bf16.msra.mxu0 0
  %59 = vmatprep.subr.bf16.mxu0 0
  %60 = vmatpush1.bf16.msra.mxu0 0
  %61 = vmatprep.subr.bf16.mxu0 0
  %62 = vmatpush1.bf16.msra.mxu0 0
  %63 = vmatprep.subr.bf16.mxu0 0
  %64 = vmatpush1.bf16.msra.mxu0 0
  %65 = vmatprep.subr.bf16.mxu0 0
  %66 = vmatpush1.bf16.msra.mxu0 0
  %67 = vmatprep.subr.bf16.mxu0 0
  %68 = vmatpush1.bf16.msra.mxu0 0
  %69 = vmatprep.subr.bf16.mxu0 0
  %70 = vmatpush1.bf16.msra.mxu0 0
  %71 = vmatprep.subr.bf16.mxu0 0
  %72 = vmatpush1.bf16.msra.mxu0 0
  %73 = vmatprep.subr.bf16.mxu0 0
  %74 = vmatpush1.bf16.msra.mxu0 0
  %75 = vmatprep.subr.bf16.mxu0 0
  %76 = vmatpush1.bf16.msra.mxu0 0
  %77 = vmatprep.subr.bf16.mxu0 0
  %78 = vmatpush1.bf16.msra.mxu0 0
  %79 = vmatprep.subr.bf16.mxu0 0
  %80 = vmatpush1.bf16.msra.mxu0 0
  %81 = vmatprep.mubr.bf16.mxu0 0
  %82 = vmatmul.mubr.bf16.gmra.mrb[0].mxu0 %v43
  %v83 = vpop.f32.mrb[0].mxu0
  %v84 = vadd.f32 %v40, %v83
  %v85 = vpop.f32.mrb[0].mxu0
  %v86 = vpop.f32.mrb[0].mxu0
  %v87 = vpop.f32.mrb[0].mxu0
  %88 = vdwg.mxu0
  %v89 = vmax.f32 %v84, 0.0
  %v90 = vld [vmem:[%s1] sm:$0xff]
  %v91 = vld [vmem:[%s1 + $0x8] sm:$0xff]
  %v92 = vld [vmem:[%s1 + $0x10] sm:$0xff]
  %v93 = vld [vmem:[%s1 + $0x18] sm:$0xff]
  %v94 = vld [vmem:[%s1 + $0x20] sm:$0xff]
  %v95 = vld [vmem:[%s1 + $0x28] sm:$0xff]
  %v96 = vld [vmem:[%s5] sm:$0xff]
  %v97 = vld [vmem:[%s5 + $0x8] sm:$0xff]
  %v98 = vld [vmem:[%s5 + $0x10] sm:$0xff]
  %v99 = vld [vmem:[%s5 + $0x18] sm:$0xff]
  %v100 = vld [vmem:[%s5 + $0x20] sm:$0xff]
  %v101 = vld [vmem:[%s5 + $0x28] sm:$0xff]
  %v102 = vld [vmem:[%s5 + $0x30] sm:$0xff]
  %v103 = vld [vmem:[%s5 + $0x38] sm:$0xff]
  %v104 = vld [vmem:[%s5 + $0x40] sm:$0xff]
  %v105 = vld [vmem:[%s5 + $0x48] sm:$0xff]
  %v106 = vld [vmem:[%s5 + $0x50] sm:$0xff]
  %v107 = vld [vmem:[%s5 + $0x58] sm:$0xff]
  %v108 = vld [vmem:[%s5 + $0x60] sm:$0xff]
  %v109 = vld [vmem:[%s5 + $0x68] sm:$0xff]
  %v110 = vld [vmem:[%s5 + $0x70] sm:$0xff]
  %v111 = vld [vmem:[%s5 + $0x78] sm:$0xff]
  %v112 = vld [vmem:[%s5 + $0x80] sm:$0xff]
  %v113 = vld [vmem:[%s5 + $0x88] sm:$0xff]
  %v114 = vld [vmem:[%s5 + $0x90] sm:$0xff]
  %v115 = vld [vmem:[%s5 + $0x98] sm:$0xff]
  %v116 = vld [vmem:[%s5 + $0xa0] sm:$0xff]
  %v117 = vld [vmem:[%s5 + $0xa8] sm:$0xff]
  %v118 = vld [vmem:[%s5 + $0xb0] sm:$0xff]
  %v119 = vld [vmem:[%s5 + $0xb8] sm:$0xff]
  %v120 = vld [vmem:[%s5 + $0xc0] sm:$0xff]
  %v121 = vld [vmem:[%s5 + $0xc8] sm:$0xff]
  %v122 = vld [vmem:[%s5 + $0xd0] sm:$0xff]
  %v123 = vld [vmem:[%s5 + $0xd8] sm:$0xff]
  %v124 = vld [vmem:[%s5 + $0xe0] sm:$0xff]
  %v125 = vld [vmem:[%s5 + $0xe8] sm:$0xff]
  %v126 = vld [vmem:[%s5 + $0xf0] sm:$0xff]
  %v127 = vld [vmem:[%s5 + $0xf8] sm:$0xff]
  %v128 = vld [vmem:[%s5 + $0x100] sm:$0xff]
  %v129 = vld [vmem:[%s5 + $0x108] sm:$0xff]
  %v130 = vld [vmem:[%s5 + $0x110] sm:$0xff]
  %v131 = vld [vmem:[%s5 + $0x118] sm:$0xff]
  %v132 = vld [vmem:[%s5 + $0x120] sm:$0xff]
  %v133 = vld [vmem:[%s5 + $0x128] sm:$0x1f]
  %v134 = vpack.c.bf16 %v93, %v90
  %v135 = vpack.c.bf16 %v94, %v91
  %v136 = vpack.c.bf16 %v95, %v92
  %v137 = vpack.c.bf16 %v97, %v96
  %v138 = vpack.c.bf16 %v99, %v98
  %v139 = vpack.c.bf16 %v101, %v100
  %v140 = vpack.c.bf16 %v103, %v102
  %v141 = vpack.c.bf16 %v105, %v104
  %v142 = vpack.c.bf16 %v107, %v106
  %v143 = vpack.c.bf16 %v109, %v108
  %v144 = vpack.c.bf16 %v111, %v110
  %v145 = vpack.c.bf16 %v113, %v112
  %v146 = vpack.c.bf16 %v115, %v114
  %v147 = vpack.c.bf16 %v117, %v116
  %v148 = vpack.c.bf16 %v119, %v118
  %v149 = vpack.c.bf16 %v121, %v120
  %v150 = vpack.c.bf16 %v123, %v122
  %v151 = vpack.c.bf16 %v125, %v124
  %v152 = vpack.c.bf16 %v127, %v126
  %v153 = vpack.c.bf16 %v129, %v128
  %v154 = vpack.c.bf16 %v131, %v130
  %v155 = vpack.c.bf16 %v133, %v132
  %v156 = vld [vmem:[%s9 + $0x1] ss:$0 sm:$0xff]
  %vm157 = vcmask 367616
  %v159 = vsel %vm157, %v136, 0
  %vm161 = vcmask 1045504
  %vm162 = vcmask 1046528
  %v163 = vsel %vm161, 4294967295, 65535
  %v164 = vsel %vm162, %v163, 0
  %v166 = vand.u32 %v155, %v164
  %168 = vmatprep.subr.bf16.mxu0 0
  %169 = vmatpush1.bf16.msra.mxu0 %v137
  %170 = vmatprep.subr.bf16.mxu0 0
  %171 = vmatpush1.bf16.msra.mxu0 %v138
  %172 = vmatprep.subr.bf16.mxu0 0
  %173 = vmatpush1.bf16.msra.mxu0 %v139
  %174 = vmatprep.subr.bf16.mxu0 0
  %175 = vmatpush1.bf16.msra.mxu0 %v140
  %176 = vmatprep.subr.bf16.mxu0 0
  %177 = vmatpush1.bf16.msra.mxu0 %v141
  %178 = vmatprep.subr.bf16.mxu0 0
  %179 = vmatpush1.bf16.msra.mxu0 %v142
  %180 = vmatprep.subr.bf16.mxu0 0
  %181 = vmatpush1.bf16.msra.mxu0 %v143
  %182 = vmatprep.subr.bf16.mxu0 0
  %183 = vmatpush1.bf16.msra.mxu0 %v144
  %184 = vmatprep.subr.bf16.mxu0 0
  %185 = vmatpush1.bf16.msra.mxu0 %v145
  %186 = vmatprep.subr.bf16.mxu0 0
  %187 = vmatpush1.bf16.msra.mxu0 %v146
  %188 = vmatprep.subr.bf16.mxu0 0
  %189 = vmatpush1.bf16.msra.mxu0 %v147
  %190 = vmatprep.subr.bf16.mxu0 0
  %191 = vmatpush1.bf16.msra.mxu0 %v148
  %192 = vmatprep.subr.bf16.mxu0 0
  %193 = vmatpush1.bf16.msra.mxu0 %v149
  %194 = vmatprep.subr.bf16.mxu0 0
  %195 = vmatpush1.bf16.msra.mxu0 %v150
  %196 = vmatprep.subr.bf16.mxu0 0
  %197 = vmatpush1.bf16.msra.mxu0 %v151
  %198 = vmatprep.subr.bf16.mxu0 0
  %199 = vmatpush1.bf16.msra.mxu0 %v152
  %200 = vmatprep.mubr.bf16.mxu0 %v135
  %201 = vmatmul.mubr.bf16.gmra.mrb[0].mxu0 %v134
  %v202 = vpop.f32.mrb[0].mxu0
  %v203 = vadd.f32 %v156, %v202
  %v204 = vpop.f32.mrb[0].mxu0
  %v205 = vpop.f32.mrb[0].mxu0
  %v206 = vadd.f32 %v156, %v205
  %v207 = vpop.f32.mrb[0].mxu0
  %208 = vdwg.mxu0
  %209 = vmatprep.subr.bf16.mxu0 0
  %210 = vmatpush1.bf16.msra.mxu0 %v153
  %211 = vmatprep.subr.bf16.mxu0 0
  %212 = vmatpush1.bf16.msra.mxu0 %v154
  %213 = vmatprep.subr.bf16.mxu0 0
  %214 = vmatpush1.bf16.msra.mxu0 %v166
  %215 = vmatprep.subr.bf16.mxu0 0
  %216 = vmatpush1.bf16.msra.mxu0 0
  %217 = vmatprep.subr.bf16.mxu0 0
  %218 = vmatpush1.bf16.msra.mxu0 0
  %219 = vmatprep.subr.bf16.mxu0 0
  %220 = vmatpush1.bf16.msra.mxu0 0
  %221 = vmatprep.subr.bf16.mxu0 0
  %222 = vmatpush1.bf16.msra.mxu0 0
  %223 = vmatprep.subr.bf16.mxu0 0
  %224 = vmatpush1.bf16.msra.mxu0 0
  %225 = vmatprep.subr.bf16.mxu0 0
  %226 = vmatpush1.bf16.msra.mxu0 0
  %227 = vmatprep.subr.bf16.mxu0 0
  %228 = vmatpush1.bf16.msra.mxu0 0
  %229 = vmatprep.subr.bf16.mxu0 0
  %230 = vmatpush1.bf16.msra.mxu0 0
  %231 = vmatprep.subr.bf16.mxu0 0
  %232 = vmatpush1.bf16.msra.mxu0 0
  %233 = vmatprep.subr.bf16.mxu0 0
  %234 = vmatpush1.bf16.msra.mxu0 0
  %235 = vmatprep.subr.bf16.mxu0 0
  %236 = vmatpush1.bf16.msra.mxu0 0
  %237 = vmatprep.subr.bf16.mxu0 0
  %238 = vmatpush1.bf16.msra.mxu0 0
  %239 = vmatprep.subr.bf16.mxu0 0
  %240 = vmatpush1.bf16.msra.mxu0 0
  %241 = vmatprep.mubr.bf16.mxu0 0
  %242 = vmatmul.mubr.bf16.gmra.mrb[0].mxu0 %v159
  %v243 = vpop.f32.mrb[0].mxu0
  %v244 = vadd.f32 %v203, %v243
  %v245 = vpop.f32.mrb[0].mxu0
  %v246 = vpop.f32.mrb[0].mxu0
  %v247 = vadd.f32 %v206, %v246
  %v248 = vpop.f32.mrb[0].mxu0
  %249 = vdwg.mxu0
  %v250 = vmax.f32 %v244, 0.0
  %v251 = vmax.f32 %v247, 0.0
  %v252 = vld [vmem:[%s6] sm:$0xff]
  %v253 = vld [vmem:[%s6 + $0x8] sm:$0xff]
  %v254 = vld [vmem:[%s6 + $0x10] sm:$0xff]
  %v255 = vld [vmem:[%s6 + $0x18] sm:$0xff]
  %v256 = vld [vmem:[%s6 + $0x20] sm:$0xff]
  %v257 = vld [vmem:[%s6 + $0x28] sm:$0xff]
  %v258 = vld [vmem:[%s6 + $0x30] sm:$0xff]
  %v259 = vld [vmem:[%s6 + $0x38] sm:$0xff]
  %v260 = vld [vmem:[%s6 + $0x40] sm:$0xff]
  %v261 = vld [vmem:[%s6 + $0x48] sm:$0xff]
  %v262 = vld [vmem:[%s6 + $0x50] sm:$0xff]
  %v263 = vld [vmem:[%s6 + $0x58] sm:$0xff]
  %v264 = vld [vmem:[%s6 + $0x60] sm:$0xff]
  %v265 = vld [vmem:[%s6 + $0x68] sm:$0xff]
  %v266 = vld [vmem:[%s6 + $0x70] sm:$0xff]
  %v267 = vld [vmem:[%s6 + $0x78] sm:$0xff]
  %v268 = vpack.c.bf16 %v251, %v250
  %v269 = vpack.c.bf16 %v253, %v252
  %v270 = vpack.c.bf16 %v255, %v254
  %v271 = vpack.c.bf16 %v257, %v256
  %v272 = vpack.c.bf16 %v259, %v258
  %v273 = vpack.c.bf16 %v261, %v260
  %v274 = vpack.c.bf16 %v263, %v262
  %v275 = vpack.c.bf16 %v265, %v264
  %v276 = vpack.c.bf16 %v267, %v266
  %v277 = vld [vmem:[%s9 + $0x2] ss:$0 sm:$0xff]
  %278 = vmatprep.subr.bf16.mxu0 0
  %279 = vmatpush1.bf16.msra.mxu0 %v269
  %280 = vmatprep.subr.bf16.mxu0 0
  %281 = vmatpush1.bf16.msra.mxu0 %v270
  %282 = vmatprep.subr.bf16.mxu0 0
  %283 = vmatpush1.bf16.msra.mxu0 %v271
  %284 = vmatprep.subr.bf16.mxu0 0
  %285 = vmatpush1.bf16.msra.mxu0 %v272
  %286 = vmatprep.subr.bf16.mxu0 0
  %287 = vmatpush1.bf16.msra.mxu0 %v273
  %288 = vmatprep.subr.bf16.mxu0 0
  %289 = vmatpush1.bf16.msra.mxu0 %v274
  %290 = vmatprep.subr.bf16.mxu0 0
  %291 = vmatpush1.bf16.msra.mxu0 %v275
  %292 = vmatprep.subr.bf16.mxu0 0
  %293 = vmatpush1.bf16.msra.mxu0 %v276
  %294 = vmatprep.subr.bf16.mxu0 0
  %295 = vmatpush1.bf16.msra.mxu0 0
  %296 = vmatprep.subr.bf16.mxu0 0
  %297 = vmatpush1.bf16.msra.mxu0 0
  %298 = vmatprep.subr.bf16.mxu0 0
  %299 = vmatpush1.bf16.msra.mxu0 0
  %300 = vmatprep.subr.bf16.mxu0 0
  %301 = vmatpush1.bf16.msra.mxu0 0
  %302 = vmatprep.subr.bf16.mxu0 0
  %303 = vmatpush1.bf16.msra.mxu0 0
  %304 = vmatprep.subr.bf16.mxu0 0
  %305 = vmatpush1.bf16.msra.mxu0 0
  %306 = vmatprep.subr.bf16.mxu0 0
  %307 = vmatpush1.bf16.msra.mxu0 0
  %308 = vmatprep.subr.bf16.mxu0 0
  %309 = vmatpush1.bf16.msra.mxu0 0
  %310 = vmatprep.mubr.bf16.mxu0 0
  %311 = vmatmul.mubr.bf16.gmra.mrb[0].mxu0 %v268
  %v312 = vpop.f32.mrb[0].mxu0
  %v313 = vadd.f32 %v277, %v312
  %v314 = vpop.f32.mrb[0].mxu0
  %v315 = vpop.f32.mrb[0].mxu0
  %v316 = vadd.f32 %v277, %v315
  %v317 = vpop.f32.mrb[0].mxu0
  %318 = vdwg.mxu0
  %v319 = vmax.f32 %v313, 0.0
  %v320 = vmax.f32 %v316, 0.0
  %v321 = vld [vmem:[%s7] sm:$0xff]
  %v322 = vld [vmem:[%s7 + $0x8] sm:$0xff]
  %v323 = vld [vmem:[%s7 + $0x10] sm:$0xff]
  %v324 = vld [vmem:[%s7 + $0x18] sm:$0xff]
  %v325 = vld [vmem:[%s7 + $0x20] sm:$0xff]
  %v326 = vld [vmem:[%s7 + $0x28] sm:$0xff]
  %v327 = vld [vmem:[%s7 + $0x30] sm:$0xff]
  %v328 = vld [vmem:[%s7 + $0x38] sm:$0xff]
  %v329 = vpack.c.bf16 %v320, %v319
  %v330 = vpack.c.bf16 %v322, %v321
  %v331 = vpack.c.bf16 %v324, %v323
  %v332 = vpack.c.bf16 %v326, %v325
  %v333 = vpack.c.bf16 %v328, %v327
  %v334 = vld [vmem:[%s9 + $0x3] ss:$0 sm:$0xff]
  %vm335 = vcmask 523264
  %v337 = vsel %vm335, %v329, 0
  %339 = vmatprep.subr.bf16.mxu0 0
  %340 = vmatpush1.bf16.msra.mxu0 %v330
  %341 = vmatprep.subr.bf16.mxu0 0
  %342 = vmatpush1.bf16.msra.mxu0 %v331
  %343 = vmatprep.subr.bf16.mxu0 0
  %344 = vmatpush1.bf16.msra.mxu0 %v332
  %345 = vmatprep.subr.bf16.mxu0 0
  %346 = vmatpush1.bf16.msra.mxu0 %v333
  %347 = vmatprep.subr.bf16.mxu0 0
  %348 = vmatpush1.bf16.msra.mxu0 0
  %349 = vmatprep.subr.bf16.mxu0 0
  %350 = vmatpush1.bf16.msra.mxu0 0
  %351 = vmatprep.subr.bf16.mxu0 0
  %352 = vmatpush1.bf16.msra.mxu0 0
  %353 = vmatprep.subr.bf16.mxu0 0
  %354 = vmatpush1.bf16.msra.mxu0 0
  %355 = vmatprep.subr.bf16.mxu0 0
  %356 = vmatpush1.bf16.msra.mxu0 0
  %357 = vmatprep.subr.bf16.mxu0 0
  %358 = vmatpush1.bf16.msra.mxu0 0
  %359 = vmatprep.subr.bf16.mxu0 0
  %360 = vmatpush1.bf16.msra.mxu0 0
  %361 = vmatprep.subr.bf16.mxu0 0
  %362 = vmatpush1.bf16.msra.mxu0 0
  %363 = vmatprep.subr.bf16.mxu0 0
  %364 = vmatpush1.bf16.msra.mxu0 0
  %365 = vmatprep.subr.bf16.mxu0 0
  %366 = vmatpush1.bf16.msra.mxu0 0
  %367 = vmatprep.subr.bf16.mxu0 0
  %368 = vmatpush1.bf16.msra.mxu0 0
  %369 = vmatprep.subr.bf16.mxu0 0
  %370 = vmatpush1.bf16.msra.mxu0 0
  %371 = vmatprep.mubr.bf16.mxu0 0
  %372 = vmatmul.mubr.bf16.gmra.mrb[0].mxu0 %v337
  %v373 = vpop.f32.mrb[0].mxu0
  %v374 = vadd.f32 %v334, %v373
  %v375 = vpop.f32.mrb[0].mxu0
  %v376 = vpop.f32.mrb[0].mxu0
  %v377 = vadd.f32 %v334, %v376
  %v378 = vpop.f32.mrb[0].mxu0
  %379 = vdwg.mxu0
  %v380 = vmax.f32 %v374, 0.0
  %v381 = vmax.f32 %v377, 0.0
  %v382 = vld [vmem:[%s2] sm:$0x1]
  %v383 = vlaneseq
  %v384 = vshrl.u32 %v383, 7
  %v385 = vlaneseq
  %v386 = vshrl.u32 %v385, 7
  %v387 = vsub.s32 0, %v386
  %v388 = vrot.slane %v382, %v387
  %vm389 = vcmp.eq.s32.totalorder %v388, %v384
  %v390 = vsel %vm389, 1, 0
  %v391 = vcvt.s32.f32 %v390
  %v392 = vpack.c.bf16 %v391, %v391
  %v393 = vpack.c.bf16 %v381, %v380
  %vm394 = vcmask 130048
  %v396 = vsel %vm394, %v392, 0
  %398 = vmatprep.subr.bf16.mxu0 0
  %399 = vmatpush1.bf16.msra.mxu0 %v393
  %400 = vmatprep.subr.bf16.mxu0 0
  %401 = vmatpush1.bf16.msra.mxu0 0
  %402 = vmatprep.subr.bf16.mxu0 0
  %403 = vmatpush1.bf16.msra.mxu0 0
  %404 = vmatprep.subr.bf16.mxu0 0
  %405 = vmatpush1.bf16.msra.mxu0 0
  %406 = vmatprep.subr.bf16.mxu0 0
  %407 = vmatpush1.bf16.msra.mxu0 0
  %408 = vmatprep.subr.bf16.mxu0 0
  %409 = vmatpush1.bf16.msra.mxu0 0
  %410 = vmatprep.subr.bf16.mxu0 0
  %411 = vmatpush1.bf16.msra.mxu0 0
  %412 = vmatprep.subr.bf16.mxu0 0
  %413 = vmatpush1.bf16.msra.mxu0 0
  %414 = vmatprep.subr.bf16.mxu0 0
  %415 = vmatpush1.bf16.msra.mxu0 0
  %416 = vmatprep.subr.bf16.mxu0 0
  %417 = vmatpush1.bf16.msra.mxu0 0
  %418 = vmatprep.subr.bf16.mxu0 0
  %419 = vmatpush1.bf16.msra.mxu0 0
  %420 = vmatprep.subr.bf16.mxu0 0
  %421 = vmatpush1.bf16.msra.mxu0 0
  %422 = vmatprep.subr.bf16.mxu0 0
  %423 = vmatpush1.bf16.msra.mxu0 0
  %424 = vmatprep.subr.bf16.mxu0 0
  %425 = vmatpush1.bf16.msra.mxu0 0
  %426 = vmatprep.subr.bf16.mxu0 0
  %427 = vmatpush1.bf16.msra.mxu0 0
  %428 = vmatprep.subr.bf16.mxu0 0
  %429 = vmatpush1.bf16.msra.mxu0 0
  %430 = vmatprep.mubr.bf16.mxu0 0
  %431 = vmatmul.mubr.bf16.gmra.mrb[0].mxu0 %v396
  %v432 = vpop.f32.mrb[0].mxu0
  %v433 = vadd.f32 0.0, %v432
  %v434 = vpop.f32.mrb[0].mxu0
  %v435 = vpop.f32.mrb[0].mxu0
  %v436 = vpop.f32.mrb[0].mxu0
  %437 = vdwg.mxu0
  %v438 = vunpack.c.l.bf16 %v392
  %v439 = vsel %vm394, %v438, 0.0
  %440 = vadd.xlane.f32.xlu0 %v439
  %v441 = vpop.xlane.xlu0 %440
  %s442 = scalar_lea.vmem %s8, 320
  %v443 = vld [vmem:[%s442] sm:$0xff]
  %v444 = vld [vmem:[%s442 + $0x8] sm:$0xff]
  %v445 = vld [vmem:[%s442 + $0x10] sm:$0xff]
  %v446 = vld [vmem:[%s442 + $0x18] sm:$0xff]
  %v447 = vld [vmem:[%s442 + $0x20] sm:$0xff]
  %v448 = vld [vmem:[%s442 + $0x28] sm:$0xff]
  %v449 = vld [vmem:[%s442 + $0x30] sm:$0xff]
  %v450 = vld [vmem:[%s442 + $0x38] sm:$0xff]
  %v451 = vpack.c.bf16 %v433, %v433
  %v452 = vpack.c.bf16 %v445, %v443
  %v453 = vpack.c.bf16 %v446, %v444
  %v454 = vpack.c.bf16 %v449, %v447
  %v455 = vpack.c.bf16 %v450, %v448
  %s456 = scalar_lea.vmem %s9, 4
  %v457 = vld [vmem:[%s456] ss:$8 sm:$0x3]
  %v459 = vlaneseq
  %v460 = vshrl.u32 %v459, 7
  %v461 = vsub.s32 0, %v460
  %v462 = vrot.slane %v457, %v461
  %v463 = vlaneseq
  %v464 = vshrl.u32 %v463, 7
  %v465 = vsub.s32 1, %v464
  %v466 = vrot.slane %v457, %v465
  %v469 = vmul.f32 %v441, %v462
  %v470 = vmul.f32 %v441, %v466
  %vm471 = vcmask 261120
  %v473 = vsel %vm471, %v451, 0
  %475 = vmatprep.subr.bf16.mxu0 %v453
  %476 = vmatpush1.bf16.msra.mxu0 %v452
  %477 = vmatprep.subr.bf16.mxu0 %v455
  %478 = vmatpush1.bf16.msra.mxu0 %v454
  %479 = vmatprep.subr.bf16.mxu0 0
  %480 = vmatpush1.bf16.msra.mxu0 0
  %481 = vmatprep.subr.bf16.mxu0 0
  %482 = vmatpush1.bf16.msra.mxu0 0
  %483 = vmatprep.subr.bf16.mxu0 0
  %484 = vmatpush1.bf16.msra.mxu0 0
  %485 = vmatprep.subr.bf16.mxu0 0
  %486 = vmatpush1.bf16.msra.mxu0 0
  %487 = vmatprep.subr.bf16.mxu0 0
  %488 = vmatpush1.bf16.msra.mxu0 0
  %489 = vmatprep.subr.bf16.mxu0 0
  %490 = vmatpush1.bf16.msra.mxu0 0
  %491 = vmatprep.subr.bf16.mxu0 0
  %492 = vmatpush1.bf16.msra.mxu0 0
  %493 = vmatprep.subr.bf16.mxu0 0
  %494 = vmatpush1.bf16.msra.mxu0 0
  %495 = vmatprep.subr.bf16.mxu0 0
  %496 = vmatpush1.bf16.msra.mxu0 0
  %497 = vmatprep.subr.bf16.mxu0 0
  %498 = vmatpush1.bf16.msra.mxu0 0
  %499 = vmatprep.subr.bf16.mxu0 0
  %500 = vmatpush1.bf16.msra.mxu0 0
  %501 = vmatprep.subr.bf16.mxu0 0
  %502 = vmatpush1.bf16.msra.mxu0 0
  %503 = vmatprep.subr.bf16.mxu0 0
  %504 = vmatpush1.bf16.msra.mxu0 0
  %505 = vmatprep.subr.bf16.mxu0 0
  %506 = vmatpush1.bf16.msra.mxu0 0
  %507 = vmatprep.mubr.bf16.mxu0 0
  %508 = vmatmul.mubr.bf16.gmra.mrb[0].mxu0 %v473
  %v509 = vpop.f32.mrb[0].mxu0
  %v510 = vadd.f32 %v469, %v509
  %v511 = vpop.f32.mrb[0].mxu0
  %v512 = vadd.f32 %v470, %v511
  %v513 = vpop.f32.mrb[0].mxu0
  %v514 = vpop.f32.mrb[0].mxu0
  %515 = vdwg.mxu0
  %s516 = scalar_lea.vmem %s9, 5
  %v517 = vld [vmem:[%s516] ss:$8 sm:$0x3]
  %v519 = vlaneseq
  %v520 = vshrl.u32 %v519, 7
  %v521 = vsub.s32 0, %v520
  %v522 = vrot.slane %v517, %v521
  %v523 = vlaneseq
  %v524 = vshrl.u32 %v523, 7
  %v525 = vsub.s32 1, %v524
  %v526 = vrot.slane %v517, %v525
  %v529 = vadd.f32 %v510, %v522
  %v530 = vadd.f32 %v512, %v526
  %v531 = vld [vmem:[%s3] sm:$0xf]
  %v532 = vld [vmem:[%s8] sm:$0xff]
  %v533 = vld [vmem:[%s8 + $0x10] sm:$0xff]
  %v534 = vld [vmem:[%s8 + $0x20] sm:$0xff]
  %v535 = vld [vmem:[%s8 + $0x30] sm:$0xff]
  %v536 = vpack.c.bf16 %v89, %v89
  %v537 = vpack.c.bf16 %v533, %v532
  %v538 = vpack.c.bf16 %v535, %v534
  %v540 = vsel %vm471, %v536, 0
  %542 = vmatprep.subr.bf16.mxu0 0
  %543 = vmatpush1.bf16.msra.mxu0 %v537
  %544 = vmatprep.subr.bf16.mxu0 0
  %545 = vmatpush1.bf16.msra.mxu0 %v538
  %546 = vmatprep.subr.bf16.mxu0 0
  %547 = vmatpush1.bf16.msra.mxu0 0
  %548 = vmatprep.subr.bf16.mxu0 0
  %549 = vmatpush1.bf16.msra.mxu0 0
  %550 = vmatprep.subr.bf16.mxu0 0
  %551 = vmatpush1.bf16.msra.mxu0 0
  %552 = vmatprep.subr.bf16.mxu0 0
  %553 = vmatpush1.bf16.msra.mxu0 0
  %554 = vmatprep.subr.bf16.mxu0 0
  %555 = vmatpush1.bf16.msra.mxu0 0
  %556 = vmatprep.subr.bf16.mxu0 0
  %557 = vmatpush1.bf16.msra.mxu0 0
  %558 = vmatprep.subr.bf16.mxu0 0
  %559 = vmatpush1.bf16.msra.mxu0 0
  %560 = vmatprep.subr.bf16.mxu0 0
  %561 = vmatpush1.bf16.msra.mxu0 0
  %562 = vmatprep.subr.bf16.mxu0 0
  %563 = vmatpush1.bf16.msra.mxu0 0
  %564 = vmatprep.subr.bf16.mxu0 0
  %565 = vmatpush1.bf16.msra.mxu0 0
  %566 = vmatprep.subr.bf16.mxu0 0
  %567 = vmatpush1.bf16.msra.mxu0 0
  %568 = vmatprep.subr.bf16.mxu0 0
  %569 = vmatpush1.bf16.msra.mxu0 0
  %570 = vmatprep.subr.bf16.mxu0 0
  %571 = vmatpush1.bf16.msra.mxu0 0
  %572 = vmatprep.subr.bf16.mxu0 0
  %573 = vmatpush1.bf16.msra.mxu0 0
  %574 = vmatprep.mubr.bf16.mxu0 0
  %575 = vmatmul.mubr.bf16.gmra.mrb[0].mxu0 %v540
  %v576 = vpop.f32.mrb[0].mxu0
  %v577 = vadd.f32 0.0, %v576
  %v578 = vpop.f32.mrb[0].mxu0
  %v579 = vpop.f32.mrb[0].mxu0
  %v580 = vpop.f32.mrb[0].mxu0
  %581 = vdwg.mxu0
  %v582 = vpack.c.bf16 %v577, %v577
  %584 = vrot.lane.b32.xlu0 %v577, 96
  %v585 = vpop.permute.xlu0 %584
  %v588 = vsel %vm41, %v531, 0
  %v591 = vsel %vm45, %v582, 0
  %593 = vmatprep.subr.bf16.mxu0 0
  %594 = vmatpush1.bf16.msra.mxu0 %v591
  %595 = vmatprep.subr.bf16.mxu0 0
  %596 = vmatpush1.bf16.msra.mxu0 0
  %597 = vmatprep.subr.bf16.mxu0 0
  %598 = vmatpush1.bf16.msra.mxu0 0
  %599 = vmatprep.subr.bf16.mxu0 0
  %600 = vmatpush1.bf16.msra.mxu0 0
  %601 = vmatprep.subr.bf16.mxu0 0
  %602 = vmatpush1.bf16.msra.mxu0 0
  %603 = vmatprep.subr.bf16.mxu0 0
  %604 = vmatpush1.bf16.msra.mxu0 0
  %605 = vmatprep.subr.bf16.mxu0 0
  %606 = vmatpush1.bf16.msra.mxu0 0
  %607 = vmatprep.subr.bf16.mxu0 0
  %608 = vmatpush1.bf16.msra.mxu0 0
  %609 = vmatprep.subr.bf16.mxu0 0
  %610 = vmatpush1.bf16.msra.mxu0 0
  %611 = vmatprep.subr.bf16.mxu0 0
  %612 = vmatpush1.bf16.msra.mxu0 0
  %613 = vmatprep.subr.bf16.mxu0 0
  %614 = vmatpush1.bf16.msra.mxu0 0
  %615 = vmatprep.subr.bf16.mxu0 0
  %616 = vmatpush1.bf16.msra.mxu0 0
  %617 = vmatprep.subr.bf16.mxu0 0
  %618 = vmatpush1.bf16.msra.mxu0 0
  %619 = vmatprep.subr.bf16.mxu0 0
  %620 = vmatpush1.bf16.msra.mxu0 0
  %621 = vmatprep.subr.bf16.mxu0 0
  %622 = vmatpush1.bf16.msra.mxu0 0
  %623 = vmatprep.subr.bf16.mxu0 0
  %624 = vmatpush1.bf16.msra.mxu0 0
  %625 = vmatprep.mubr.bf16.mxu0 0
  %626 = vmatmul.mubr.bf16.gmra.mrb[0].mxu0 %v588
  %v627 = vpop.f32.mrb[0].mxu0
  %v628 = vadd.f32 %v585, %v627
  %v629 = vpop.f32.mrb[0].mxu0
  %v630 = vpop.f32.mrb[0].mxu0
  %v631 = vpop.f32.mrb[0].mxu0
  %632 = vdwg.mxu0
  %v633 = vadd.f32 %v628, %v529
  %v634 = vmax.f32 %v633, 0.0
  %s635 = scalar_lea.vmem %s8, 64
  %v636 = vld [vmem:[%s635] sm:$0xff]
  %v637 = vld [vmem:[%s635 + $0x10] sm:$0xff]
  %v638 = vld [vmem:[%s635 + $0x20] sm:$0xff]
  %v639 = vld [vmem:[%s635 + $0x30] sm:$0xff]
  %v640 = vpack.c.bf16 %v634, %v634
  %v641 = vpack.c.bf16 %v637, %v636
  %v642 = vpack.c.bf16 %v639, %v638
  %v644 = vsel %vm471, %v640, 0
  %646 = vmatprep.subr.bf16.mxu0 0
  %647 = vmatpush1.bf16.msra.mxu0 %v641
  %648 = vmatprep.subr.bf16.mxu0 0
  %649 = vmatpush1.bf16.msra.mxu0 %v642
  %650 = vmatprep.subr.bf16.mxu0 0
  %651 = vmatpush1.bf16.msra.mxu0 0
  %652 = vmatprep.subr.bf16.mxu0 0
  %653 = vmatpush1.bf16.msra.mxu0 0
  %654 = vmatprep.subr.bf16.mxu0 0
  %655 = vmatpush1.bf16.msra.mxu0 0
  %656 = vmatprep.subr.bf16.mxu0 0
  %657 = vmatpush1.bf16.msra.mxu0 0
  %658 = vmatprep.subr.bf16.mxu0 0
  %659 = vmatpush1.bf16.msra.mxu0 0
  %660 = vmatprep.subr.bf16.mxu0 0
  %661 = vmatpush1.bf16.msra.mxu0 0
  %662 = vmatprep.subr.bf16.mxu0 0
  %663 = vmatpush1.bf16.msra.mxu0 0
  %664 = vmatprep.subr.bf16.mxu0 0
  %665 = vmatpush1.bf16.msra.mxu0 0
  %666 = vmatprep.subr.bf16.mxu0 0
  %667 = vmatpush1.bf16.msra.mxu0 0
  %668 = vmatprep.subr.bf16.mxu0 0
  %669 = vmatpush1.bf16.msra.mxu0 0
  %670 = vmatprep.subr.bf16.mxu0 0
  %671 = vmatpush1.bf16.msra.mxu0 0
  %672 = vmatprep.subr.bf16.mxu0 0
  %673 = vmatpush1.bf16.msra.mxu0 0
  %674 = vmatprep.subr.bf16.mxu0 0
  %675 = vmatpush1.bf16.msra.mxu0 0
  %676 = vmatprep.subr.bf16.mxu0 0
  %677 = vmatpush1.bf16.msra.mxu0 0
  %678 = vmatprep.mubr.bf16.mxu0 0
  %679 = vmatmul.mubr.bf16.gmra.mrb[0].mxu0 %v644
  %v680 = vpop.f32.mrb[0].mxu0
  %v681 = vadd.f32 0.0, %v680
  %v682 = vpop.f32.mrb[0].mxu0
  %v683 = vpop.f32.mrb[0].mxu0
  %v684 = vpop.f32.mrb[0].mxu0
  %685 = vdwg.mxu0
  %v686 = vpack.c.bf16 %v681, %v681
  %688 = vrot.lane.b32.xlu0 %v681, 96
  %v689 = vpop.permute.xlu0 %688
  %v692 = vsel %vm45, %v686, 0
  %694 = vmatprep.subr.bf16.mxu0 0
  %695 = vmatpush1.bf16.msra.mxu0 %v692
  %696 = vmatprep.subr.bf16.mxu0 0
  %697 = vmatpush1.bf16.msra.mxu0 0
  %698 = vmatprep.subr.bf16.mxu0 0
  %699 = vmatpush1.bf16.msra.mxu0 0
  %700 = vmatprep.subr.bf16.mxu0 0
  %701 = vmatpush1.bf16.msra.mxu0 0
  %702 = vmatprep.subr.bf16.mxu0 0
  %703 = vmatpush1.bf16.msra.mxu0 0
  %704 = vmatprep.subr.bf16.mxu0 0
  %705 = vmatpush1.bf16.msra.mxu0 0
  %706 = vmatprep.subr.bf16.mxu0 0
  %707 = vmatpush1.bf16.msra.mxu0 0
  %708 = vmatprep.subr.bf16.mxu0 0
  %709 = vmatpush1.bf16.msra.mxu0 0
  %710 = vmatprep.subr.bf16.mxu0 0
  %711 = vmatpush1.bf16.msra.mxu0 0
  %712 = vmatprep.subr.bf16.mxu0 0
  %713 = vmatpush1.bf16.msra.mxu0 0
  %714 = vmatprep.subr.bf16.mxu0 0
  %715 = vmatpush1.bf16.msra.mxu0 0
  %716 = vmatprep.subr.bf16.mxu0 0
  %717 = vmatpush1.bf16.msra.mxu0 0
  %718 = vmatprep.subr.bf16.mxu0 0
  %719 = vmatpush1.bf16.msra.mxu0 0
  %720 = vmatprep.subr.bf16.mxu0 0
  %721 = vmatpush1.bf16.msra.mxu0 0
  %722 = vmatprep.subr.bf16.mxu0 0
  %723 = vmatpush1.bf16.msra.mxu0 0
  %724 = vmatprep.subr.bf16.mxu0 0
  %725 = vmatpush1.bf16.msra.mxu0 0
  %726 = vmatprep.mubr.bf16.mxu0 0
  %727 = vmatmul.mubr.bf16.gmra.mrb[0].mxu0 %v588
  %v728 = vpop.f32.mrb[0].mxu0
  %v729 = vadd.f32 %v689, %v728
  %v730 = vpop.f32.mrb[0].mxu0
  %v731 = vpop.f32.mrb[0].mxu0
  %v732 = vpop.f32.mrb[0].mxu0
  %733 = vdwg.mxu0
  %735 = vrot.lane.b32.xlu0 %v529, 96
  %v736 = vpop.permute.xlu0 %735
  %v738 = vadd.f32 %v729, %v736
  %v739 = vmax.f32 %v738, 0.0
  %s740 = scalar_lea.vmem %s8, 128
  %v741 = vld [vmem:[%s740] sm:$0xff]
  %v742 = vld [vmem:[%s740 + $0x10] sm:$0xff]
  %v743 = vld [vmem:[%s740 + $0x20] sm:$0xff]
  %v744 = vld [vmem:[%s740 + $0x30] sm:$0xff]
  %v745 = vpack.c.bf16 %v739, %v739
  %v746 = vpack.c.bf16 %v742, %v741
  %v747 = vpack.c.bf16 %v744, %v743
  %v749 = vsel %vm471, %v745, 0
  %751 = vmatprep.subr.bf16.mxu0 0
  %752 = vmatpush1.bf16.msra.mxu0 %v746
  %753 = vmatprep.subr.bf16.mxu0 0
  %754 = vmatpush1.bf16.msra.mxu0 %v747
  %755 = vmatprep.subr.bf16.mxu0 0
  %756 = vmatpush1.bf16.msra.mxu0 0
  %757 = vmatprep.subr.bf16.mxu0 0
  %758 = vmatpush1.bf16.msra.mxu0 0
  %759 = vmatprep.subr.bf16.mxu0 0
  %760 = vmatpush1.bf16.msra.mxu0 0
  %761 = vmatprep.subr.bf16.mxu0 0
  %762 = vmatpush1.bf16.msra.mxu0 0
  %763 = vmatprep.subr.bf16.mxu0 0
  %764 = vmatpush1.bf16.msra.mxu0 0
  %765 = vmatprep.subr.bf16.mxu0 0
  %766 = vmatpush1.bf16.msra.mxu0 0
  %767 = vmatprep.subr.bf16.mxu0 0
  %768 = vmatpush1.bf16.msra.mxu0 0
  %769 = vmatprep.subr.bf16.mxu0 0
  %770 = vmatpush1.bf16.msra.mxu0 0
  %771 = vmatprep.subr.bf16.mxu0 0
  %772 = vmatpush1.bf16.msra.mxu0 0
  %773 = vmatprep.subr.bf16.mxu0 0
  %774 = vmatpush1.bf16.msra.mxu0 0
  %775 = vmatprep.subr.bf16.mxu0 0
  %776 = vmatpush1.bf16.msra.mxu0 0
  %777 = vmatprep.subr.bf16.mxu0 0
  %778 = vmatpush1.bf16.msra.mxu0 0
  %779 = vmatprep.subr.bf16.mxu0 0
  %780 = vmatpush1.bf16.msra.mxu0 0
  %781 = vmatprep.subr.bf16.mxu0 0
  %782 = vmatpush1.bf16.msra.mxu0 0
  %783 = vmatprep.mubr.bf16.mxu0 0
  %784 = vmatmul.mubr.bf16.gmra.mrb[0].mxu0 %v749
  %v785 = vpop.f32.mrb[0].mxu0
  %v786 = vadd.f32 0.0, %v785
  %v787 = vpop.f32.mrb[0].mxu0
  %v788 = vpop.f32.mrb[0].mxu0
  %v789 = vpop.f32.mrb[0].mxu0
  %790 = vdwg.mxu0
  %v791 = vpack.c.bf16 %v786, %v786
  %793 = vrot.lane.b32.xlu0 %v786, 96
  %v794 = vpop.permute.xlu0 %793
  %v797 = vsel %vm45, %v791, 0
  %799 = vmatprep.subr.bf16.mxu0 0
  %800 = vmatpush1.bf16.msra.mxu0 %v797
  %801 = vmatprep.subr.bf16.mxu0 0
  %802 = vmatpush1.bf16.msra.mxu0 0
  %803 = vmatprep.subr.bf16.mxu0 0
  %804 = vmatpush1.bf16.msra.mxu0 0
  %805 = vmatprep.subr.bf16.mxu0 0
  %806 = vmatpush1.bf16.msra.mxu0 0
  %807 = vmatprep.subr.bf16.mxu0 0
  %808 = vmatpush1.bf16.msra.mxu0 0
  %809 = vmatprep.subr.bf16.mxu0 0
  %810 = vmatpush1.bf16.msra.mxu0 0
  %811 = vmatprep.subr.bf16.mxu0 0
  %812 = vmatpush1.bf16.msra.mxu0 0
  %813 = vmatprep.subr.bf16.mxu0 0
  %814 = vmatpush1.bf16.msra.mxu0 0
  %815 = vmatprep.subr.bf16.mxu0 0
  %816 = vmatpush1.bf16.msra.mxu0 0
  %817 = vmatprep.subr.bf16.mxu0 0
  %818 = vmatpush1.bf16.msra.mxu0 0
  %819 = vmatprep.subr.bf16.mxu0 0
  %820 = vmatpush1.bf16.msra.mxu0 0
  %821 = vmatprep.subr.bf16.mxu0 0
  %822 = vmatpush1.bf16.msra.mxu0 0
  %823 = vmatprep.subr.bf16.mxu0 0
  %824 = vmatpush1.bf16.msra.mxu0 0
  %825 = vmatprep.subr.bf16.mxu0 0
  %826 = vmatpush1.bf16.msra.mxu0 0
  %827 = vmatprep.subr.bf16.mxu0 0
  %828 = vmatpush1.bf16.msra.mxu0 0
  %829 = vmatprep.subr.bf16.mxu0 0
  %830 = vmatpush1.bf16.msra.mxu0 0
  %831 = vmatprep.mubr.bf16.mxu0 0
  %832 = vmatmul.mubr.bf16.gmra.mrb[0].mxu0 %v588
  %v833 = vpop.f32.mrb[0].mxu0
  %v834 = vadd.f32 %v794, %v833
  %v835 = vpop.f32.mrb[0].mxu0
  %v836 = vpop.f32.mrb[0].mxu0
  %v837 = vpop.f32.mrb[0].mxu0
  %838 = vdwg.mxu0
  %839 = vrot.lane.b32.xlu0 %v529, 64
  %v840 = vpop.permute.xlu0 %839
  %v842 = vadd.f32 %v834, %v840
  %v843 = vmax.f32 %v842, 0.0
  %s844 = scalar_lea.vmem %s8, 192
  %v845 = vld [vmem:[%s844] sm:$0xff]
  %v846 = vld [vmem:[%s844 + $0x10] sm:$0xff]
  %v847 = vld [vmem:[%s844 + $0x20] sm:$0xff]
  %v848 = vld [vmem:[%s844 + $0x30] sm:$0xff]
  %v849 = vpack.c.bf16 %v843, %v843
  %v850 = vpack.c.bf16 %v846, %v845
  %v851 = vpack.c.bf16 %v848, %v847
  %v853 = vsel %vm471, %v849, 0
  %855 = vmatprep.subr.bf16.mxu0 0
  %856 = vmatpush1.bf16.msra.mxu0 %v850
  %857 = vmatprep.subr.bf16.mxu0 0
  %858 = vmatpush1.bf16.msra.mxu0 %v851
  %859 = vmatprep.subr.bf16.mxu0 0
  %860 = vmatpush1.bf16.msra.mxu0 0
  %861 = vmatprep.subr.bf16.mxu0 0
  %862 = vmatpush1.bf16.msra.mxu0 0
  %863 = vmatprep.subr.bf16.mxu0 0
  %864 = vmatpush1.bf16.msra.mxu0 0
  %865 = vmatprep.subr.bf16.mxu0 0
  %866 = vmatpush1.bf16.msra.mxu0 0
  %867 = vmatprep.subr.bf16.mxu0 0
  %868 = vmatpush1.bf16.msra.mxu0 0
  %869 = vmatprep.subr.bf16.mxu0 0
  %870 = vmatpush1.bf16.msra.mxu0 0
  %871 = vmatprep.subr.bf16.mxu0 0
  %872 = vmatpush1.bf16.msra.mxu0 0
  %873 = vmatprep.subr.bf16.mxu0 0
  %874 = vmatpush1.bf16.msra.mxu0 0
  %875 = vmatprep.subr.bf16.mxu0 0
  %876 = vmatpush1.bf16.msra.mxu0 0
  %877 = vmatprep.subr.bf16.mxu0 0
  %878 = vmatpush1.bf16.msra.mxu0 0
  %879 = vmatprep.subr.bf16.mxu0 0
  %880 = vmatpush1.bf16.msra.mxu0 0
  %881 = vmatprep.subr.bf16.mxu0 0
  %882 = vmatpush1.bf16.msra.mxu0 0
  %883 = vmatprep.subr.bf16.mxu0 0
  %884 = vmatpush1.bf16.msra.mxu0 0
  %885 = vmatprep.subr.bf16.mxu0 0
  %886 = vmatpush1.bf16.msra.mxu0 0
  %887 = vmatprep.mubr.bf16.mxu0 0
  %888 = vmatmul.mubr.bf16.gmra.mrb[0].mxu0 %v853
  %v889 = vpop.f32.mrb[0].mxu0
  %v890 = vadd.f32 0.0, %v889
  %v891 = vpop.f32.mrb[0].mxu0
  %v892 = vpop.f32.mrb[0].mxu0
  %v893 = vpop.f32.mrb[0].mxu0
  %894 = vdwg.mxu0
  %v895 = vpack.c.bf16 %v890, %v890
  %897 = vrot.lane.b32.xlu0 %v890, 96
  %v898 = vpop.permute.xlu0 %897
  %v901 = vsel %vm45, %v895, 0
  %903 = vmatprep.subr.bf16.mxu0 0
  %904 = vmatpush1.bf16.msra.mxu0 %v901
  %905 = vmatprep.subr.bf16.mxu0 0
  %906 = vmatpush1.bf16.msra.mxu0 0
  %907 = vmatprep.subr.bf16.mxu0 0
  %908 = vmatpush1.bf16.msra.mxu0 0
  %909 = vmatprep.subr.bf16.mxu0 0
  %910 = vmatpush1.bf16.msra.mxu0 0
  %911 = vmatprep.subr.bf16.mxu0 0
  %912 = vmatpush1.bf16.msra.mxu0 0
  %913 = vmatprep.subr.bf16.mxu0 0
  %914 = vmatpush1.bf16.msra.mxu0 0
  %915 = vmatprep.subr.bf16.mxu0 0
  %916 = vmatpush1.bf16.msra.mxu0 0
  %917 = vmatprep.subr.bf16.mxu0 0
  %918 = vmatpush1.bf16.msra.mxu0 0
  %919 = vmatprep.subr.bf16.mxu0 0
  %920 = vmatpush1.bf16.msra.mxu0 0
  %921 = vmatprep.subr.bf16.mxu0 0
  %922 = vmatpush1.bf16.msra.mxu0 0
  %923 = vmatprep.subr.bf16.mxu0 0
  %924 = vmatpush1.bf16.msra.mxu0 0
  %925 = vmatprep.subr.bf16.mxu0 0
  %926 = vmatpush1.bf16.msra.mxu0 0
  %927 = vmatprep.subr.bf16.mxu0 0
  %928 = vmatpush1.bf16.msra.mxu0 0
  %929 = vmatprep.subr.bf16.mxu0 0
  %930 = vmatpush1.bf16.msra.mxu0 0
  %931 = vmatprep.subr.bf16.mxu0 0
  %932 = vmatpush1.bf16.msra.mxu0 0
  %933 = vmatprep.subr.bf16.mxu0 0
  %934 = vmatpush1.bf16.msra.mxu0 0
  %935 = vmatprep.mubr.bf16.mxu0 0
  %936 = vmatmul.mubr.bf16.gmra.mrb[0].mxu0 %v588
  %v937 = vpop.f32.mrb[0].mxu0
  %v938 = vadd.f32 %v898, %v937
  %v939 = vpop.f32.mrb[0].mxu0
  %v940 = vpop.f32.mrb[0].mxu0
  %v941 = vpop.f32.mrb[0].mxu0
  %942 = vdwg.mxu0
  %943 = vrot.lane.b32.xlu0 %v529, 32
  %v944 = vpop.permute.xlu0 %943
  %v946 = vadd.f32 %v938, %v944
  %v947 = vmax.f32 %v946, 0.0
  %s948 = scalar_lea.vmem %s8, 256
  %v949 = vld [vmem:[%s948] sm:$0xff]
  %v950 = vld [vmem:[%s948 + $0x10] sm:$0xff]
  %v951 = vld [vmem:[%s948 + $0x20] sm:$0xff]
  %v952 = vld [vmem:[%s948 + $0x30] sm:$0xff]
  %v953 = vpack.c.bf16 %v947, %v947
  %v954 = vpack.c.bf16 %v950, %v949
  %v955 = vpack.c.bf16 %v952, %v951
  %v957 = vsel %vm471, %v953, 0
  %959 = vmatprep.subr.bf16.mxu0 0
  %960 = vmatpush1.bf16.msra.mxu0 %v954
  %961 = vmatprep.subr.bf16.mxu0 0
  %962 = vmatpush1.bf16.msra.mxu0 %v955
  %963 = vmatprep.subr.bf16.mxu0 0
  %964 = vmatpush1.bf16.msra.mxu0 0
  %965 = vmatprep.subr.bf16.mxu0 0
  %966 = vmatpush1.bf16.msra.mxu0 0
  %967 = vmatprep.subr.bf16.mxu0 0
  %968 = vmatpush1.bf16.msra.mxu0 0
  %969 = vmatprep.subr.bf16.mxu0 0
  %970 = vmatpush1.bf16.msra.mxu0 0
  %971 = vmatprep.subr.bf16.mxu0 0
  %972 = vmatpush1.bf16.msra.mxu0 0
  %973 = vmatprep.subr.bf16.mxu0 0
  %974 = vmatpush1.bf16.msra.mxu0 0
  %975 = vmatprep.subr.bf16.mxu0 0
  %976 = vmatpush1.bf16.msra.mxu0 0
  %977 = vmatprep.subr.bf16.mxu0 0
  %978 = vmatpush1.bf16.msra.mxu0 0
  %979 = vmatprep.subr.bf16.mxu0 0
  %980 = vmatpush1.bf16.msra.mxu0 0
  %981 = vmatprep.subr.bf16.mxu0 0
  %982 = vmatpush1.bf16.msra.mxu0 0
  %983 = vmatprep.subr.bf16.mxu0 0
  %984 = vmatpush1.bf16.msra.mxu0 0
  %985 = vmatprep.subr.bf16.mxu0 0
  %986 = vmatpush1.bf16.msra.mxu0 0
  %987 = vmatprep.subr.bf16.mxu0 0
  %988 = vmatpush1.bf16.msra.mxu0 0
  %989 = vmatprep.subr.bf16.mxu0 0
  %990 = vmatpush1.bf16.msra.mxu0 0
  %991 = vmatprep.mubr.bf16.mxu0 0
  %992 = vmatmul.mubr.bf16.gmra.mrb[0].mxu0 %v957
  %v993 = vpop.f32.mrb[0].mxu0
  %v994 = vadd.f32 0.0, %v993
  %v995 = vpop.f32.mrb[0].mxu0
  %v996 = vpop.f32.mrb[0].mxu0
  %v997 = vpop.f32.mrb[0].mxu0
  %998 = vdwg.mxu0
  %v999 = vpack.c.bf16 %v994, %v994
  %1001 = vrot.lane.b32.xlu0 %v994, 96
  %v1002 = vpop.permute.xlu0 %1001
  %v1005 = vsel %vm45, %v999, 0
  %1007 = vmatprep.subr.bf16.mxu0 0
  %1008 = vmatpush1.bf16.msra.mxu0 %v1005
  %1009 = vmatprep.subr.bf16.mxu0 0
  %1010 = vmatpush1.bf16.msra.mxu0 0
  %1011 = vmatprep.subr.bf16.mxu0 0
  %1012 = vmatpush1.bf16.msra.mxu0 0
  %1013 = vmatprep.subr.bf16.mxu0 0
  %1014 = vmatpush1.bf16.msra.mxu0 0
  %1015 = vmatprep.subr.bf16.mxu0 0
  %1016 = vmatpush1.bf16.msra.mxu0 0
  %1017 = vmatprep.subr.bf16.mxu0 0
  %1018 = vmatpush1.bf16.msra.mxu0 0
  %1019 = vmatprep.subr.bf16.mxu0 0
  %1020 = vmatpush1.bf16.msra.mxu0 0
  %1021 = vmatprep.subr.bf16.mxu0 0
  %1022 = vmatpush1.bf16.msra.mxu0 0
  %1023 = vmatprep.subr.bf16.mxu0 0
  %1024 = vmatpush1.bf16.msra.mxu0 0
  %1025 = vmatprep.subr.bf16.mxu0 0
  %1026 = vmatpush1.bf16.msra.mxu0 0
  %1027 = vmatprep.subr.bf16.mxu0 0
  %1028 = vmatpush1.bf16.msra.mxu0 0
  %1029 = vmatprep.subr.bf16.mxu0 0
  %1030 = vmatpush1.bf16.msra.mxu0 0
  %1031 = vmatprep.subr.bf16.mxu0 0
  %1032 = vmatpush1.bf16.msra.mxu0 0
  %1033 = vmatprep.subr.bf16.mxu0 0
  %1034 = vmatpush1.bf16.msra.mxu0 0
  %1035 = vmatprep.subr.bf16.mxu0 0
  %1036 = vmatpush1.bf16.msra.mxu0 0
  %1037 = vmatprep.subr.bf16.mxu0 0
  %1038 = vmatpush1.bf16.msra.mxu0 0
  %1039 = vmatprep.mubr.bf16.mxu0 0
  %1040 = vmatmul.mubr.bf16.gmra.mrb[0].mxu0 %v588
  %v1041 = vpop.f32.mrb[0].mxu0
  %v1042 = vadd.f32 %v1002, %v1041
  %v1043 = vpop.f32.mrb[0].mxu0
  %v1044 = vpop.f32.mrb[0].mxu0
  %v1045 = vpop.f32.mrb[0].mxu0
  %1046 = vdwg.mxu0
  %v1047 = vadd.f32 %v1042, %v530
  %v1048 = vmax.f32 %v1047, 0.0
  %s1049 = scalar_lea.vmem %s8, 384
  %v1050 = vld [vmem:[%s1049] sm:$0xff]
  %v1051 = vld [vmem:[%s1049 + $0x10] sm:$0xff]
  %v1052 = vld [vmem:[%s1049 + $0x20] sm:$0xff]
  %v1053 = vld [vmem:[%s1049 + $0x30] sm:$0xff]
  %v1054 = vpack.c.bf16 %v1048, %v1048
  %v1055 = vpack.c.bf16 %v1051, %v1050
  %v1056 = vpack.c.bf16 %v1053, %v1052
  %v1057 = vld [vmem:[%s9 + $0x6] ss:$0 sm:$0xff]
  %v1059 = vsel %vm471, %v1054, 0
  %1061 = vmatprep.subr.bf16.mxu0 0
  %1062 = vmatpush1.bf16.msra.mxu0 %v1055
  %1063 = vmatprep.subr.bf16.mxu0 0
  %1064 = vmatpush1.bf16.msra.mxu0 %v1056
  %1065 = vmatprep.subr.bf16.mxu0 0
  %1066 = vmatpush1.bf16.msra.mxu0 0
  %1067 = vmatprep.subr.bf16.mxu0 0
  %1068 = vmatpush1.bf16.msra.mxu0 0
  %1069 = vmatprep.subr.bf16.mxu0 0
  %1070 = vmatpush1.bf16.msra.mxu0 0
  %1071 = vmatprep.subr.bf16.mxu0 0
  %1072 = vmatpush1.bf16.msra.mxu0 0
  %1073 = vmatprep.subr.bf16.mxu0 0
  %1074 = vmatpush1.bf16.msra.mxu0 0
  %1075 = vmatprep.subr.bf16.mxu0 0
  %1076 = vmatpush1.bf16.msra.mxu0 0
  %1077 = vmatprep.subr.bf16.mxu0 0
  %1078 = vmatpush1.bf16.msra.mxu0 0
  %1079 = vmatprep.subr.bf16.mxu0 0
  %1080 = vmatpush1.bf16.msra.mxu0 0
  %1081 = vmatprep.subr.bf16.mxu0 0
  %1082 = vmatpush1.bf16.msra.mxu0 0
  %1083 = vmatprep.subr.bf16.mxu0 0
  %1084 = vmatpush1.bf16.msra.mxu0 0
  %1085 = vmatprep.subr.bf16.mxu0 0
  %1086 = vmatpush1.bf16.msra.mxu0 0
  %1087 = vmatprep.subr.bf16.mxu0 0
  %1088 = vmatpush1.bf16.msra.mxu0 0
  %1089 = vmatprep.subr.bf16.mxu0 0
  %1090 = vmatpush1.bf16.msra.mxu0 0
  %1091 = vmatprep.subr.bf16.mxu0 0
  %1092 = vmatpush1.bf16.msra.mxu0 0
  %1093 = vmatprep.mubr.bf16.mxu0 0
  %1094 = vmatmul.mubr.bf16.gmra.mrb[0].mxu0 %v1059
  %v1095 = vpop.f32.mrb[0].mxu0
  %v1096 = vadd.f32 %v1057, %v1095
  %v1097 = vpop.f32.mrb[0].mxu0
  %v1098 = vpop.f32.mrb[0].mxu0
  %v1099 = vpop.f32.mrb[0].mxu0
  %1100 = vdwg.mxu0
  %1101 = vst [vmem:[%s10] sm:$0xff] %v1096
  // Predicated region
  $region42: #{bn_forward.1} parent=0 // pred_check
    _
  $region43: #{bn_forward.1} parent=0 // pred_check_branch
    %1103 = sbr.rel (0) target = $region45
  $region44: #{bn_forward.1} parent=0 // pred_region
    _
  $region45: #{bn_forward.1} parent=0 // pred_fallthru
    _
  // Predicated region
  $region46: #{bn_forward.1} parent=0 // pred_check
    _
  $region47: #{bn_forward.1} parent=0 // pred_check_branch
    %1105 = sbr.rel (0) target = $region49
  $region48: #{bn_forward.1} parent=0 // pred_region
    _
  $region49: #{bn_forward.1} parent=0 // pred_fallthru
    _

</llo_original>
